<compile_context>
chip_gen: v6e
topology: v6e:2x2x1
jax: 0.10.0
libtpu: 0.0.40
codegen_flags: <defaults>
</compile_context>

<pallas_src>
import functools

import jax
import jax.numpy as jnp
from jax.experimental import pallas as pl
from jax.experimental.pallas import tpu as pltpu

EPS = 1e-5


# --------------------------------------------------------------------------
# Structured conv weights (wrapper-side, pure JAX, constant-folded under jit)
# --------------------------------------------------------------------------
def _conv_row_mats(wt, W, d):
    """OIHW (Cout, Cin, 3, 3) dilated-conv weights -> (3, W*Cin, W*Cout).

    M[kh][w_in*Cin + ci, w_out*Cout + co] = wt[co, ci, kh, kw] with
    w_in = w_out + (kw-1)*d; entries with w_in outside [0, W) are dropped,
    which folds the width zero-padding into the matrix.
    """
    Cout, Cin, KH, KW = wt.shape
    mats = []
    for kh in range(KH):
        m = jnp.zeros((W * Cin, W * Cout), jnp.float32)
        for kw in range(KW):
            shift = (kw - KW // 2) * d                          # w_in = w_out + shift
            p = jnp.eye(W, W, -shift, dtype=jnp.float32)        # p[w_in, w_out] = 1
            m = m + jnp.kron(p, wt[:, :, kh, kw].T.astype(jnp.float32))
        mats.append(m)
    return jnp.stack(mats, axis=0)


def _pointwise_mat(ws, W):
    """1x1-conv weights (Cout, Cin) -> block-diagonal (W*Cin, W*Cout)."""
    return jnp.kron(jnp.eye(W, dtype=jnp.float32), ws.T.astype(jnp.float32))


def _channel_selector(W, C):
    """(W*C, C) matrix such that flat-row-sums @ selector = per-channel sums."""
    return jnp.tile(jnp.eye(C, dtype=jnp.float32), (W, 1))


# --------------------------------------------------------------------------
# Kernel A: dilated conv1 (+ shortcut 1x1 BN_s partial sums) + BN1 partial sums
# --------------------------------------------------------------------------
def _make_conv1_kernel(H, d, Wci, has_proj):
    def kernel(*refs):
        if has_proj:
            x_ref, m1_ref, ms_ref, sel_ref, y1_ref, st_ref, xpad = refs
        else:
            x_ref, m1_ref, sel_ref, y1_ref, st_ref, xpad = refs
        # Zero only the 2*d halo rows; interior is fully overwritten each step,
        # so this is correct for every grid step / core (no t==0 invariant).
        xpad[0:d, :] = jnp.zeros((d, Wci), jnp.float32)
        xpad[d + H:2 * d + H, :] = jnp.zeros((d, Wci), jnp.float32)
        xf = x_ref[0].astype(jnp.float32)                       # (H, W*Cin)
        xpad[d:d + H, :] = xf

        # Dilated 3x3 conv == 3 lane-dense matmuls (one per kernel row kh).
        y1 = jnp.dot(xpad[0:H, :], m1_ref[0], preferred_element_type=jnp.float32)
        y1 = y1 + jnp.dot(xf, m1_ref[1], preferred_element_type=jnp.float32)
        y1 = y1 + jnp.dot(xpad[2 * d:2 * d + H, :], m1_ref[2],
                          preferred_element_type=jnp.float32)
        y1_ref[0] = y1.astype(y1_ref.dtype)

        # Per-channel BN partial sums from the f32 pre-cast values (tiny selector matmul).
        rows = [jnp.sum(y1, axis=0, keepdims=True),
                jnp.sum(y1 * y1, axis=0, keepdims=True)]
        if has_proj:
            sc = jnp.dot(xf, ms_ref[...], preferred_element_type=jnp.float32)
            rows += [jnp.sum(sc, axis=0, keepdims=True),
                     jnp.sum(sc * sc, axis=0, keepdims=True)]
        st_ref[0] = jnp.dot(jnp.concatenate(rows, axis=0), sel_ref[...],
                            preferred_element_type=jnp.float32)
    return kernel


# --------------------------------------------------------------------------
# Kernel B: fused BN1 affine + ReLU -> dilated conv2 + BN2 partial sums
# --------------------------------------------------------------------------
def _make_conv2_kernel(H, d, Wco):
    def kernel(y1_ref, m2_ref, sc1_ref, sh1_ref, sel_ref, y2_ref, st_ref, hpad):
        hpad[0:d, :] = jnp.zeros((d, Wco), jnp.float32)
        hpad[d + H:2 * d + H, :] = jnp.zeros((d, Wco), jnp.float32)
        h = jnp.maximum(y1_ref[0].astype(jnp.float32) * sc1_ref[...] + sh1_ref[...], 0.0)
        hpad[d:d + H, :] = h

        y2 = jnp.dot(hpad[0:H, :], m2_ref[0], preferred_element_type=jnp.float32)
        y2 = y2 + jnp.dot(h, m2_ref[1], preferred_element_type=jnp.float32)
        y2 = y2 + jnp.dot(hpad[2 * d:2 * d + H, :], m2_ref[2],
                          preferred_element_type=jnp.float32)
        y2_ref[0] = y2.astype(y2_ref.dtype)

        rows = jnp.concatenate([jnp.sum(y2, axis=0, keepdims=True),
                                jnp.sum(y2 * y2, axis=0, keepdims=True)], axis=0)
        st_ref[0] = jnp.dot(rows, sel_ref[...], preferred_element_type=jnp.float32)
    return kernel


# --------------------------------------------------------------------------
# Kernel C: BN2 affine + shortcut (recomputed 1x1 + BN_s | identity) + add + ReLU
# --------------------------------------------------------------------------
def _make_residual_kernel(has_proj):
    if has_proj:
        def kernel(y2_ref, x_ref, ms_ref, s2_ref, ss_ref, sh_ref, out_ref):
            sc = jnp.dot(x_ref[0].astype(jnp.float32), ms_ref[...],
                         preferred_element_type=jnp.float32)
            out = (y2_ref[0].astype(jnp.float32) * s2_ref[...]
                   + sc * ss_ref[...] + sh_ref[...])
            out_ref[0] = jnp.maximum(out, 0.0).astype(out_ref.dtype)
    else:
        def kernel(y2_ref, x_ref, s2_ref, sh_ref, out_ref):
            out = (y2_ref[0].astype(jnp.float32) * s2_ref[...] + sh_ref[...]
                   + x_ref[0].astype(jnp.float32))
            out_ref[0] = jnp.maximum(out, 0.0).astype(out_ref.dtype)
    return kernel


# --------------------------------------------------------------------------
# BatchNorm helper (training-mode, biased variance) -> per-channel scale/shift
# --------------------------------------------------------------------------
def _bn_scale_shift(s, q, count, gamma, beta):
    # Note: E[x^2]-E[x]^2 in f32; adequate for normalized activations.  Switch to a
    # shifted-sum accumulation if activation magnitudes can be very large.
    mean = s / count
    var = jnp.maximum(q / count - mean * mean, 0.0)
    scale = gamma.reshape(-1).astype(jnp.float32) * jax.lax.rsqrt(var + EPS)
    shift = beta.reshape(-1).astype(jnp.float32) - mean * scale
    return scale, shift


# --------------------------------------------------------------------------
# Wrapper
# --------------------------------------------------------------------------
def dilated_res_block(x, params, *, dilation=2, storage_dtype=jnp.bfloat16,
                      channels_last=False):
    """Forward pass of DilatedResBlock.  x is NCHW (PyTorch) unless channels_last."""
    d = int(dilation)
    out_dtype = x.dtype
    if not channels_last:
        x = jnp.transpose(x, (0, 2, 3, 1))           # NCHW -> NHWC (smallest tensor)
    x = x.astype(jnp.float32)
    B, H, W, Cin = x.shape
    w1 = params['conv1_w']
    Cout = int(w1.shape[0])
    has_proj = params.get('sc_w', None) is not None
    Wci, Wco = W * Cin, W * Cout
    count = float(B * H * W)

    xf = x.reshape(B, H, Wci)                        # lane-dense row-flat layout (free)
    m1 = _conv_row_mats(w1, W, d)                    # (3, Wci, Wco)
    m2 = _conv_row_mats(params['conv2_w'], W, d)     # (3, Wco, Wco)
    sel = _channel_selector(W, Cout)                 # (Wco, Cout)
    ms = _pointwise_mat(params['sc_w'][:, :, 0, 0], W) if has_proj else None

    img_ci = pl.BlockSpec((1, H, Wci), lambda b: (b, 0, 0))
    img_co = pl.BlockSpec((1, H, Wco), lambda b: (b, 0, 0))
    vec = pl.BlockSpec((1, Wco), lambda b: (0, 0))
    full = lambda a: pl.BlockSpec(a.shape, lambda b: (0,) * a.ndim)
    tile_c = lambda v: jnp.tile(v.reshape(1, Cout), (1, W))   # per-channel -> (1, Wco)
    cparams = pltpu.CompilerParams(dimension_semantics=("parallel",))
    # TODO(synk): for B == 1 on v7x, split H on the parallel axis so both TensorCores
    # are used (each half re-zeroes its own halo scratch).

    # ---- kernel A: conv1 (+ 1x1 shortcut stats) + BN1 partial sums ------------------
    n_stat = 4 if has_proj else 2
    a_inputs = [xf, m1] + ([ms] if has_proj else []) + [sel]
    a_specs = [img_ci, full(m1)] + ([full(ms)] if has_proj else []) + [full(sel)]
    y1, st_a = pl.pallas_call(
        _make_conv1_kernel(H, d, Wci, has_proj),
        grid_spec=pltpu.PrefetchScalarGridSpec(
            num_scalar_prefetch=0, grid=(B,),
            in_specs=a_specs,
            out_specs=(img_co, pl.BlockSpec((1, n_stat, Cout), lambda b: (b, 0, 0))),
            scratch_shapes=[pltpu.VMEM((H + 2 * d, Wci), jnp.float32)]),
        out_shape=(jax.ShapeDtypeStruct((B, H, Wco), storage_dtype),
                   jax.ShapeDtypeStruct((B, n_stat, Cout), jnp.float32)),
        compiler_params=cparams,
    )(*a_inputs)

    st_a = jnp.sum(st_a, axis=0)                     # tiny (n_stat, Cout) reduction
    scale1, shift1 = _bn_scale_shift(st_a[0], st_a[1], count,
                                     params['bn1_g'], params['bn1_b'])

    # ---- kernel B: BN1 affine + ReLU -> conv2 + BN2 partial sums ---------------------
    y2, st_b = pl.pallas_call(
        _make_conv2_kernel(H, d, Wco),
        grid_spec=pltpu.PrefetchScalarGridSpec(
            num_scalar_prefetch=0, grid=(B,),
            in_specs=[img_co, full(m2), vec, vec, full(sel)],
            out_specs=(img_co, pl.BlockSpec((1, 2, Cout), lambda b: (b, 0, 0))),
            scratch_shapes=[pltpu.VMEM((H + 2 * d, Wco), jnp.float32)]),
        out_shape=(jax.ShapeDtypeStruct((B, H, Wco), storage_dtype),
                   jax.ShapeDtypeStruct((B, 2, Cout), jnp.float32)),
        compiler_params=cparams,
    )(y1, m2, tile_c(scale1), tile_c(shift1), sel)

    st_b = jnp.sum(st_b, axis=0)
    scale2, shift2 = _bn_scale_shift(st_b[0], st_b[1], count,
                                     params['bn2_g'], params['bn2_b'])

    # ---- kernel C: BN2 + (BN_s(1x1(x)) | x) + residual add + ReLU --------------------
    if has_proj:
        scale_s, shift_s = _bn_scale_shift(st_a[2], st_a[3], count,
                                           params['sc_g'], params['sc_b'])
        c_inputs = [y2, xf, ms, tile_c(scale2), tile_c(scale_s), tile_c(shift2 + shift_s)]
        c_specs = [img_co, img_ci, full(ms), vec, vec, vec]
    else:
        c_inputs = [y2, xf, tile_c(scale2), tile_c(shift2)]
        c_specs = [img_co, img_ci, vec, vec]
    out = pl.pallas_call(
        _make_residual_kernel(has_proj),
        grid_spec=pltpu.PrefetchScalarGridSpec(
            num_scalar_prefetch=0, grid=(B,),
            in_specs=c_specs, out_specs=img_co),
        out_shape=jax.ShapeDtypeStruct((B, H, Wco), out_dtype),
        compiler_params=cparams,
    )(*c_inputs)

    out = out.reshape(B, H, W, Cout)
    if not channels_last:
        out = jnp.transpose(out, (0, 3, 1, 2))       # NHWC -> NCHW to match PyTorch
    return out


# --------------------------------------------------------------------------
# Pure-JAX reference (for correctness check)
# --------------------------------------------------------------------------
def _ref_bn(x, g, b):
    mean = jnp.mean(x, axis=(0, 2, 3), keepdims=True)
    var = jnp.mean(jnp.square(x - mean), axis=(0, 2, 3), keepdims=True)
    return (x - mean) * jax.lax.rsqrt(var + EPS) * g.reshape(1, -1, 1, 1) + b.reshape(1, -1, 1, 1)


def reference_forward(x, params, *, dilation=2):
    d = dilation
    conv = lambda inp, w, dil, pad: jax.lax.conv_general_dilated(
        inp, w, window_strides=(1, 1), padding=[(pad, pad), (pad, pad)],
        rhs_dilation=(dil, dil), dimension_numbers=('NCHW', 'OIHW', 'NCHW'))
    if params.get('sc_w', None) is not None:
        identity = _ref_bn(conv(x, params['sc_w'], 1, 0), params['sc_g'], params['sc_b'])
    else:
        identity = x
    out = jax.nn.relu(_ref_bn(conv(x, params['conv1_w'], d, d), params['bn1_g'], params['bn1_b']))
    out = _ref_bn(conv(out, params['conv2_w'], d, d), params['bn2_g'], params['bn2_b'])
    return jax.nn.relu(out + identity)


# --------------------------------------------------------------------------
if __name__ == "__main__":
    B, Cin, Cout, H, W, dilation = 2, 4, 8, 16, 16, 2

    key = jax.random.PRNGKey(0)
    kx, k1, k2, k3, k4, k5 = jax.random.split(key, 6)

    x = jax.random.normal(kx, (B, Cin, H, W), dtype=jnp.float32)
    params = {
        # conv weights in PyTorch OIHW layout
        'conv1_w': 0.1 * jax.random.normal(k1, (Cout, Cin, 3, 3), jnp.float32),
        'conv2_w': 0.1 * jax.random.normal(k2, (Cout, Cout, 3, 3), jnp.float32),
        'sc_w':    0.1 * jax.random.normal(k3, (Cout, Cin, 1, 1), jnp.float32),
        # BatchNorm affine params: PyTorch default init (gamma=1, beta=0)
        'bn1_g': jnp.ones((Cout,), jnp.float32), 'bn1_b': jnp.zeros((Cout,), jnp.float32),
        'bn2_g': jnp.ones((Cout,), jnp.float32), 'bn2_b': jnp.zeros((Cout,), jnp.float32),
        'sc_g':  jnp.ones((Cout,), jnp.float32), 'sc_b':  jnp.zeros((Cout,), jnp.float32),
    }

    ref = reference_forward(x, params, dilation=dilation)

    # f32 HBM intermediates: tight tolerance vs the XLA reference.
    fwd_f32 = jax.jit(functools.partial(dilated_res_block, dilation=dilation,
                                        storage_dtype=jnp.float32))
    out32 = jax.block_until_ready(fwd_f32(x, params))
    assert out32.shape == (B, Cout, H, W), out32.shape
    err32 = float(jnp.max(jnp.abs(out32 - ref)))
    assert jnp.allclose(out32, ref, atol=2e-4, rtol=2e-4), err32

    # bf16 HBM intermediates (default, halves the dominant HBM traffic): looser tolerance
    # since y1/y2 round-trip HBM with ~2^-9 relative rounding (BN stats stay f32).
    fwd_bf16 = jax.jit(functools.partial(dilated_res_block, dilation=dilation))
    out16 = jax.block_until_ready(fwd_bf16(x, params))
    err16 = float(jnp.max(jnp.abs(out16.astype(jnp.float32) - ref)))
    assert err16 < 8e-2, err16

    # Identity-shortcut variant (in_channels == out_channels, no projection / BN_s).
    x2 = jax.random.normal(k4, (B, Cout, H, W), dtype=jnp.float32)
    params2 = {
        'conv1_w': 0.1 * jax.random.normal(k5, (Cout, Cout, 3, 3), jnp.float32),
        'conv2_w': params['conv2_w'],
        'sc_w': None,
        'bn1_g': params['bn1_g'], 'bn1_b': params['bn1_b'],
        'bn2_g': params['bn2_g'], 'bn2_b': params['bn2_b'],
    }
    ref2 = reference_forward(x2, params2, dilation=dilation)
    fwd2 = jax.jit(functools.partial(dilated_res_block, dilation=dilation,
                                     storage_dtype=jnp.float32))
    out2 = jax.block_until_ready(fwd2(x2, params2))
    err2 = float(jnp.max(jnp.abs(out2 - ref2)))
    assert jnp.allclose(out2, ref2, atol=2e-4, rtol=2e-4), err2

    print("KERNEL_OK")
</pallas_src>

<mosaic_0001>
module attributes {stable_mosaic.version = 11 : i64} {
  func.func @kernel(%arg0: i32, %arg1: memref<1x16x64xf32, #tpu.memory_space<vmem>>, %arg2: memref<3x64x128xf32, #tpu.memory_space<vmem>>, %arg3: memref<64x128xf32, #tpu.memory_space<vmem>>, %arg4: memref<128x8xf32, #tpu.memory_space<vmem>>, %arg5: memref<1x16x128xf32, #tpu.memory_space<vmem>>, %arg6: memref<1x4x8xf32, #tpu.memory_space<vmem>>, %arg7: memref<20x64xf32, #tpu.memory_space<vmem>>) attributes {dimension_semantics = [#tpu.dimension_semantics<parallel>], iteration_bounds = array<i64: 2>, scalar_prefetch = 0 : i64, scratch_operands = 1 : i64, tpu.core_type = #tpu.core_type<tc>, window_params = [{transform_indices = @transform_0, window_bounds = array<i64: 1, 16, 64>}, {pipeline_mode = #tpu.pipeline_mode<synchronous>, transform_indices = @transform_1, window_bounds = array<i64: 3, 64, 128>}, {pipeline_mode = #tpu.pipeline_mode<synchronous>, transform_indices = @transform_2, window_bounds = array<i64: 64, 128>}, {pipeline_mode = #tpu.pipeline_mode<synchronous>, transform_indices = @transform_3, window_bounds = array<i64: 128, 8>}, {transform_indices = @transform_4, window_bounds = array<i64: 1, 16, 128>}, {transform_indices = @transform_5, window_bounds = array<i64: 1, 4, 8>}]} {
    %cst = arith.constant 0.000000e+00 : f32
    %0 = vector.broadcast %cst : f32 to vector<2x64xf32>
    %c0 = arith.constant 0 : index
    %c0_0 = arith.constant 0 : index
    %1 = vector.load %arg7[%c0, %c0_0] : memref<20x64xf32, #tpu.memory_space<vmem>>, vector<2x64xf32>
    tpu.vector_store %arg7[%c0, %c0_0], %0 {strides = array<i32>} : memref<20x64xf32, #tpu.memory_space<vmem>>, vector<2x64xf32>,
    %cst_1 = arith.constant 0.000000e+00 : f32
    %2 = vector.broadcast %cst_1 : f32 to vector<2x64xf32>
    %c18 = arith.constant 18 : index
    %c0_2 = arith.constant 0 : index
    %3 = vector.load %arg7[%c18, %c0_2] : memref<20x64xf32, #tpu.memory_space<vmem>>, vector<2x64xf32>
    tpu.vector_store %arg7[%c18, %c0_2], %2 {strides = array<i32>} : memref<20x64xf32, #tpu.memory_space<vmem>>, vector<2x64xf32>,
    %c0_3 = arith.constant 0 : index
    %c0_4 = arith.constant 0 : index
    %c0_5 = arith.constant 0 : index
    %4 = vector.load %arg1[%c0_3, %c0_4, %c0_5] : memref<1x16x64xf32, #tpu.memory_space<vmem>>, vector<1x16x64xf32>
    %5 = vector.shape_cast %4 : vector<1x16x64xf32> to vector<16x64xf32>
    %c2 = arith.constant 2 : index
    %c0_6 = arith.constant 0 : index
    %6 = vector.load %arg7[%c2, %c0_6] : memref<20x64xf32, #tpu.memory_space<vmem>>, vector<16x64xf32>
    tpu.vector_store %arg7[%c2, %c0_6], %5 {strides = array<i32>} : memref<20x64xf32, #tpu.memory_space<vmem>>, vector<16x64xf32>,
    %c0_7 = arith.constant 0 : index
    %c0_8 = arith.constant 0 : index
    %7 = vector.load %arg7[%c0_7, %c0_8] : memref<20x64xf32, #tpu.memory_space<vmem>>, vector<16x64xf32>
    %c0_9 = arith.constant 0 : index
    %c0_10 = arith.constant 0 : index
    %c0_11 = arith.constant 0 : index
    %8 = vector.load %arg2[%c0_9, %c0_10, %c0_11] : memref<3x64x128xf32, #tpu.memory_space<vmem>>, vector<1x64x128xf32>
    %9 = vector.shape_cast %8 : vector<1x64x128xf32> to vector<64x128xf32>
    %cst_12 = arith.constant dense<0.000000e+00> : vector<16x128xf32>
    %10 = tpu.matmul %7, %9, %cst_12 {dimension_numbers = #tpu.dot_dimension_numbers<[1], [0], [0], [1], [0, 0, 1, 1], [], []>} : vector<16x64xf32>, vector<64x128xf32>, vector<16x128xf32> -> vector<16x128xf32>
    %c1 = arith.constant 1 : index
    %c0_13 = arith.constant 0 : index
    %c0_14 = arith.constant 0 : index
    %11 = vector.load %arg2[%c1, %c0_13, %c0_14] : memref<3x64x128xf32, #tpu.memory_space<vmem>>, vector<1x64x128xf32>
    %12 = vector.shape_cast %11 : vector<1x64x128xf32> to vector<64x128xf32>
    %cst_15 = arith.constant dense<0.000000e+00> : vector<16x128xf32>
    %13 = tpu.matmul %5, %12, %cst_15 {dimension_numbers = #tpu.dot_dimension_numbers<[1], [0], [0], [1], [0, 0, 1, 1], [], []>} : vector<16x64xf32>, vector<64x128xf32>, vector<16x128xf32> -> vector<16x128xf32>
    %14 = arith.addf %10, %13 : vector<16x128xf32>
    %c4 = arith.constant 4 : index
    %c0_16 = arith.constant 0 : index
    %15 = vector.load %arg7[%c4, %c0_16] : memref<20x64xf32, #tpu.memory_space<vmem>>, vector<16x64xf32>
    %c2_17 = arith.constant 2 : index
    %c0_18 = arith.constant 0 : index
    %c0_19 = arith.constant 0 : index
    %16 = vector.load %arg2[%c2_17, %c0_18, %c0_19] : memref<3x64x128xf32, #tpu.memory_space<vmem>>, vector<1x64x128xf32>
    %17 = vector.shape_cast %16 : vector<1x64x128xf32> to vector<64x128xf32>
    %cst_20 = arith.constant dense<0.000000e+00> : vector<16x128xf32>
    %18 = tpu.matmul %15, %17, %cst_20 {dimension_numbers = #tpu.dot_dimension_numbers<[1], [0], [0], [1], [0, 0, 1, 1], [], []>} : vector<16x64xf32>, vector<64x128xf32>, vector<16x128xf32> -> vector<16x128xf32>
    %19 = arith.addf %14, %18 : vector<16x128xf32>
    %c0_21 = arith.constant 0 : index
    %c0_22 = arith.constant 0 : index
    %c0_23 = arith.constant 0 : index
    %20 = vector.load %arg5[%c0_21, %c0_22, %c0_23] : memref<1x16x128xf32, #tpu.memory_space<vmem>>, vector<1x16x128xf32>
    %21 = vector.shape_cast %20 : vector<1x16x128xf32> to vector<16x128xf32>
    %22 = vector.shape_cast %19 : vector<16x128xf32> to vector<1x16x128xf32>
    tpu.vector_store %arg5[%c0_21, %c0_22, %c0_23], %22 {strides = array<i32>} : memref<1x16x128xf32, #tpu.memory_space<vmem>>, vector<1x16x128xf32>,
    %cst_24 = arith.constant dense<0.000000e+00> : vector<128xf32>
    %23 = vector.multi_reduction <add>, %19, %cst_24 [0] : vector<16x128xf32> to vector<128xf32>
    %24 = vector.shape_cast %23 : vector<128xf32> to vector<1x128xf32>
    %25 = arith.mulf %19, %19 : vector<16x128xf32>
    %cst_25 = arith.constant dense<0.000000e+00> : vector<128xf32>
    %26 = vector.multi_reduction <add>, %25, %cst_25 [0] : vector<16x128xf32> to vector<128xf32>
    %27 = vector.shape_cast %26 : vector<128xf32> to vector<1x128xf32>
    %c0_26 = arith.constant 0 : index
    %c0_27 = arith.constant 0 : index
    %28 = vector.load %arg3[%c0_26, %c0_27] : memref<64x128xf32, #tpu.memory_space<vmem>>, vector<64x128xf32>
    %cst_28 = arith.constant dense<0.000000e+00> : vector<16x128xf32>
    %29 = tpu.matmul %5, %28, %cst_28 {dimension_numbers = #tpu.dot_dimension_numbers<[1], [0], [0], [1], [0, 0, 1, 1], [], []>} : vector<16x64xf32>, vector<64x128xf32>, vector<16x128xf32> -> vector<16x128xf32>
    %cst_29 = arith.constant dense<0.000000e+00> : vector<128xf32>
    %30 = vector.multi_reduction <add>, %29, %cst_29 [0] : vector<16x128xf32> to vector<128xf32>
    %31 = vector.shape_cast %30 : vector<128xf32> to vector<1x128xf32>
    %32 = arith.mulf %29, %29 : vector<16x128xf32>
    %cst_30 = arith.constant dense<0.000000e+00> : vector<128xf32>
    %33 = vector.multi_reduction <add>, %32, %cst_30 [0] : vector<16x128xf32> to vector<128xf32>
    %34 = vector.shape_cast %33 : vector<128xf32> to vector<1x128xf32>
    %35 = tpu.concatenate %24, %27, %31, %34 in 0 : vector<1x128xf32>, vector<1x128xf32>, vector<1x128xf32>, vector<1x128xf32> -> vector<4x128xf32>
    %c0_31 = arith.constant 0 : index
    %c0_32 = arith.constant 0 : index
    %36 = vector.load %arg4[%c0_31, %c0_32] : memref<128x8xf32, #tpu.memory_space<vmem>>, vector<128x8xf32>
    %cst_33 = arith.constant dense<0.000000e+00> : vector<4x8xf32>
    %37 = tpu.matmul %35, %36, %cst_33 {dimension_numbers = #tpu.dot_dimension_numbers<[1], [0], [0], [1], [0, 0, 1, 1], [], []>} : vector<4x128xf32>, vector<128x8xf32>, vector<4x8xf32> -> vector<4x8xf32>
    %c0_34 = arith.constant 0 : index
    %c0_35 = arith.constant 0 : index
    %c0_36 = arith.constant 0 : index
    %38 = vector.load %arg6[%c0_34, %c0_35, %c0_36] : memref<1x4x8xf32, #tpu.memory_space<vmem>>, vector<1x4x8xf32>
    %39 = vector.shape_cast %38 : vector<1x4x8xf32> to vector<4x8xf32>
    %40 = vector.shape_cast %37 : vector<4x8xf32> to vector<1x4x8xf32>
    tpu.vector_store %arg6[%c0_34, %c0_35, %c0_36], %40 {strides = array<i32>} : memref<1x4x8xf32, #tpu.memory_space<vmem>>, vector<1x4x8xf32>,
    return
  }
  func.func @transform_0(%arg0: i32) -> (i32, i32, i32) {
    %c0_i32 = arith.constant 0 : i32
    %c0_i32_0 = arith.constant 0 : i32
    %c0_i32_1 = arith.constant 0 : i32
    return %arg0, %c0_i32, %c0_i32_0 : i32, i32, i32
  }
  func.func @transform_1(%arg0: i32) -> (i32, i32, i32) {
    %c0_i32 = arith.constant 0 : i32
    %c0_i32_0 = arith.constant 0 : i32
    %c0_i32_1 = arith.constant 0 : i32
    %c0_i32_2 = arith.constant 0 : i32
    return %c0_i32, %c0_i32_0, %c0_i32_1 : i32, i32, i32
  }
  func.func @transform_2(%arg0: i32) -> (i32, i32) {
    %c0_i32 = arith.constant 0 : i32
    %c0_i32_0 = arith.constant 0 : i32
    %c0_i32_1 = arith.constant 0 : i32
    return %c0_i32, %c0_i32_0 : i32, i32
  }
  func.func @transform_3(%arg0: i32) -> (i32, i32) {
    %c0_i32 = arith.constant 0 : i32
    %c0_i32_0 = arith.constant 0 : i32
    %c0_i32_1 = arith.constant 0 : i32
    return %c0_i32, %c0_i32_0 : i32, i32
  }
  func.func @transform_4(%arg0: i32) -> (i32, i32, i32) {
    %c0_i32 = arith.constant 0 : i32
    %c0_i32_0 = arith.constant 0 : i32
    %c0_i32_1 = arith.constant 0 : i32
    return %arg0, %c0_i32, %c0_i32_0 : i32, i32, i32
  }
  func.func @transform_5(%arg0: i32) -> (i32, i32, i32) {
    %c0_i32 = arith.constant 0 : i32
    %c0_i32_0 = arith.constant 0 : i32
    %c0_i32_1 = arith.constant 0 : i32
    return %arg0, %c0_i32, %c0_i32_0 : i32, i32, i32
  }
}

module attributes {stable_mosaic.version = 11 : i64} {
  func.func @kernel(%arg0: i32, %arg1: memref<1x16x128xf32, #tpu.memory_space<vmem>>, %arg2: memref<3x128x128xf32, #tpu.memory_space<vmem>>, %arg3: memref<1x128xf32, #tpu.memory_space<vmem>>, %arg4: memref<1x128xf32, #tpu.memory_space<vmem>>, %arg5: memref<128x8xf32, #tpu.memory_space<vmem>>, %arg6: memref<1x16x128xf32, #tpu.memory_space<vmem>>, %arg7: memref<1x2x8xf32, #tpu.memory_space<vmem>>, %arg8: memref<20x128xf32, #tpu.memory_space<vmem>>) attributes {dimension_semantics = [#tpu.dimension_semantics<parallel>], iteration_bounds = array<i64: 2>, scalar_prefetch = 0 : i64, scratch_operands = 1 : i64, tpu.core_type = #tpu.core_type<tc>, window_params = [{transform_indices = @transform_0, window_bounds = array<i64: 1, 16, 128>}, {pipeline_mode = #tpu.pipeline_mode<synchronous>, transform_indices = @transform_1, window_bounds = array<i64: 3, 128, 128>}, {pipeline_mode = #tpu.pipeline_mode<synchronous>, transform_indices = @transform_2, window_bounds = array<i64: 1, 128>}, {pipeline_mode = #tpu.pipeline_mode<synchronous>, transform_indices = @transform_3, window_bounds = array<i64: 1, 128>}, {pipeline_mode = #tpu.pipeline_mode<synchronous>, transform_indices = @transform_4, window_bounds = array<i64: 128, 8>}, {transform_indices = @transform_5, window_bounds = array<i64: 1, 16, 128>}, {transform_indices = @transform_6, window_bounds = array<i64: 1, 2, 8>}]} {
    %cst = arith.constant 0.000000e+00 : f32
    %0 = vector.broadcast %cst : f32 to vector<2x128xf32>
    %c0 = arith.constant 0 : index
    %c0_0 = arith.constant 0 : index
    %1 = vector.load %arg8[%c0, %c0_0] : memref<20x128xf32, #tpu.memory_space<vmem>>, vector<2x128xf32>
    tpu.vector_store %arg8[%c0, %c0_0], %0 {strides = array<i32>} : memref<20x128xf32, #tpu.memory_space<vmem>>, vector<2x128xf32>,
    %cst_1 = arith.constant 0.000000e+00 : f32
    %2 = vector.broadcast %cst_1 : f32 to vector<2x128xf32>
    %c18 = arith.constant 18 : index
    %c0_2 = arith.constant 0 : index
    %3 = vector.load %arg8[%c18, %c0_2] : memref<20x128xf32, #tpu.memory_space<vmem>>, vector<2x128xf32>
    tpu.vector_store %arg8[%c18, %c0_2], %2 {strides = array<i32>} : memref<20x128xf32, #tpu.memory_space<vmem>>, vector<2x128xf32>,
    %c0_3 = arith.constant 0 : index
    %c0_4 = arith.constant 0 : index
    %c0_5 = arith.constant 0 : index
    %4 = vector.load %arg1[%c0_3, %c0_4, %c0_5] : memref<1x16x128xf32, #tpu.memory_space<vmem>>, vector<1x16x128xf32>
    %5 = vector.shape_cast %4 : vector<1x16x128xf32> to vector<16x128xf32>
    %c0_6 = arith.constant 0 : index
    %c0_7 = arith.constant 0 : index
    %6 = vector.load %arg3[%c0_6, %c0_7] : memref<1x128xf32, #tpu.memory_space<vmem>>, vector<1x128xf32>
    %7 = vector.broadcast %6 : vector<1x128xf32> to vector<16x128xf32>
    %8 = arith.mulf %5, %7 : vector<16x128xf32>
    %c0_8 = arith.constant 0 : index
    %c0_9 = arith.constant 0 : index
    %9 = vector.load %arg4[%c0_8, %c0_9] : memref<1x128xf32, #tpu.memory_space<vmem>>, vector<1x128xf32>
    %10 = vector.broadcast %9 : vector<1x128xf32> to vector<16x128xf32>
    %11 = arith.addf %8, %10 : vector<16x128xf32>
    %cst_10 = arith.constant 0.000000e+00 : f32
    %12 = vector.broadcast %cst_10 : f32 to vector<16x128xf32>
    %13 = arith.maximumf %11, %12 : vector<16x128xf32>
    %c2 = arith.constant 2 : index
    %c0_11 = arith.constant 0 : index
    %14 = vector.load %arg8[%c2, %c0_11] : memref<20x128xf32, #tpu.memory_space<vmem>>, vector<16x128xf32>
    tpu.vector_store %arg8[%c2, %c0_11], %13 {strides = array<i32>} : memref<20x128xf32, #tpu.memory_space<vmem>>, vector<16x128xf32>,
    %c0_12 = arith.constant 0 : index
    %c0_13 = arith.constant 0 : index
    %15 = vector.load %arg8[%c0_12, %c0_13] : memref<20x128xf32, #tpu.memory_space<vmem>>, vector<16x128xf32>
    %c0_14 = arith.constant 0 : index
    %c0_15 = arith.constant 0 : index
    %c0_16 = arith.constant 0 : index
    %16 = vector.load %arg2[%c0_14, %c0_15, %c0_16] : memref<3x128x128xf32, #tpu.memory_space<vmem>>, vector<1x128x128xf32>
    %17 = vector.shape_cast %16 : vector<1x128x128xf32> to vector<128x128xf32>
    %cst_17 = arith.constant dense<0.000000e+00> : vector<16x128xf32>
    %18 = tpu.matmul %15, %17, %cst_17 {dimension_numbers = #tpu.dot_dimension_numbers<[1], [0], [0], [1], [0, 0, 1, 1], [], []>} : vector<16x128xf32>, vector<128x128xf32>, vector<16x128xf32> -> vector<16x128xf32>
    %c1 = arith.constant 1 : index
    %c0_18 = arith.constant 0 : index
    %c0_19 = arith.constant 0 : index
    %19 = vector.load %arg2[%c1, %c0_18, %c0_19] : memref<3x128x128xf32, #tpu.memory_space<vmem>>, vector<1x128x128xf32>
    %20 = vector.shape_cast %19 : vector<1x128x128xf32> to vector<128x128xf32>
    %cst_20 = arith.constant dense<0.000000e+00> : vector<16x128xf32>
    %21 = tpu.matmul %13, %20, %cst_20 {dimension_numbers = #tpu.dot_dimension_numbers<[1], [0], [0], [1], [0, 0, 1, 1], [], []>} : vector<16x128xf32>, vector<128x128xf32>, vector<16x128xf32> -> vector<16x128xf32>
    %22 = arith.addf %18, %21 : vector<16x128xf32>
    %c4 = arith.constant 4 : index
    %c0_21 = arith.constant 0 : index
    %23 = vector.load %arg8[%c4, %c0_21] : memref<20x128xf32, #tpu.memory_space<vmem>>, vector<16x128xf32>
    %c2_22 = arith.constant 2 : index
    %c0_23 = arith.constant 0 : index
    %c0_24 = arith.constant 0 : index
    %24 = vector.load %arg2[%c2_22, %c0_23, %c0_24] : memref<3x128x128xf32, #tpu.memory_space<vmem>>, vector<1x128x128xf32>
    %25 = vector.shape_cast %24 : vector<1x128x128xf32> to vector<128x128xf32>
    %cst_25 = arith.constant dense<0.000000e+00> : vector<16x128xf32>
    %26 = tpu.matmul %23, %25, %cst_25 {dimension_numbers = #tpu.dot_dimension_numbers<[1], [0], [0], [1], [0, 0, 1, 1], [], []>} : vector<16x128xf32>, vector<128x128xf32>, vector<16x128xf32> -> vector<16x128xf32>
    %27 = arith.addf %22, %26 : vector<16x128xf32>
    %c0_26 = arith.constant 0 : index
    %c0_27 = arith.constant 0 : index
    %c0_28 = arith.constant 0 : index
    %28 = vector.load %arg6[%c0_26, %c0_27, %c0_28] : memref<1x16x128xf32, #tpu.memory_space<vmem>>, vector<1x16x128xf32>
    %29 = vector.shape_cast %28 : vector<1x16x128xf32> to vector<16x128xf32>
    %30 = vector.shape_cast %27 : vector<16x128xf32> to vector<1x16x128xf32>
    tpu.vector_store %arg6[%c0_26, %c0_27, %c0_28], %30 {strides = array<i32>} : memref<1x16x128xf32, #tpu.memory_space<vmem>>, vector<1x16x128xf32>,
    %cst_29 = arith.constant dense<0.000000e+00> : vector<128xf32>
    %31 = vector.multi_reduction <add>, %27, %cst_29 [0] : vector<16x128xf32> to vector<128xf32>
    %32 = vector.shape_cast %31 : vector<128xf32> to vector<1x128xf32>
    %33 = arith.mulf %27, %27 : vector<16x128xf32>
    %cst_30 = arith.constant dense<0.000000e+00> : vector<128xf32>
    %34 = vector.multi_reduction <add>, %33, %cst_30 [0] : vector<16x128xf32> to vector<128xf32>
    %35 = vector.shape_cast %34 : vector<128xf32> to vector<1x128xf32>
    %36 = tpu.concatenate %32, %35 in 0 : vector<1x128xf32>, vector<1x128xf32> -> vector<2x128xf32>
    %c0_31 = arith.constant 0 : index
    %c0_32 = arith.constant 0 : index
    %37 = vector.load %arg5[%c0_31, %c0_32] : memref<128x8xf32, #tpu.memory_space<vmem>>, vector<128x8xf32>
    %cst_33 = arith.constant dense<0.000000e+00> : vector<2x8xf32>
    %38 = tpu.matmul %36, %37, %cst_33 {dimension_numbers = #tpu.dot_dimension_numbers<[1], [0], [0], [1], [0, 0, 1, 1], [], []>} : vector<2x128xf32>, vector<128x8xf32>, vector<2x8xf32> -> vector<2x8xf32>
    %c0_34 = arith.constant 0 : index
    %c0_35 = arith.constant 0 : index
    %c0_36 = arith.constant 0 : index
    %39 = vector.load %arg7[%c0_34, %c0_35, %c0_36] : memref<1x2x8xf32, #tpu.memory_space<vmem>>, vector<1x2x8xf32>
    %40 = vector.shape_cast %39 : vector<1x2x8xf32> to vector<2x8xf32>
    %41 = vector.shape_cast %38 : vector<2x8xf32> to vector<1x2x8xf32>
    tpu.vector_store %arg7[%c0_34, %c0_35, %c0_36], %41 {strides = array<i32>} : memref<1x2x8xf32, #tpu.memory_space<vmem>>, vector<1x2x8xf32>,
    return
  }
  func.func @transform_0(%arg0: i32) -> (i32, i32, i32) {
    %c0_i32 = arith.constant 0 : i32
    %c0_i32_0 = arith.constant 0 : i32
    %c0_i32_1 = arith.constant 0 : i32
    return %arg0, %c0_i32, %c0_i32_0 : i32, i32, i32
  }
  func.func @transform_1(%arg0: i32) -> (i32, i32, i32) {
    %c0_i32 = arith.constant 0 : i32
    %c0_i32_0 = arith.constant 0 : i32
    %c0_i32_1 = arith.constant 0 : i32
    %c0_i32_2 = arith.constant 0 : i32
    return %c0_i32, %c0_i32_0, %c0_i32_1 : i32, i32, i32
  }
  func.func @transform_2(%arg0: i32) -> (i32, i32) {
    %c0_i32 = arith.constant 0 : i32
    %c0_i32_0 = arith.constant 0 : i32
    %c0_i32_1 = arith.constant 0 : i32
    return %c0_i32, %c0_i32_0 : i32, i32
  }
  func.func @transform_3(%arg0: i32) -> (i32, i32) {
    %c0_i32 = arith.constant 0 : i32
    %c0_i32_0 = arith.constant 0 : i32
    %c0_i32_1 = arith.constant 0 : i32
    return %c0_i32, %c0_i32_0 : i32, i32
  }
  func.func @transform_4(%arg0: i32) -> (i32, i32) {
    %c0_i32 = arith.constant 0 : i32
    %c0_i32_0 = arith.constant 0 : i32
    %c0_i32_1 = arith.constant 0 : i32
    return %c0_i32, %c0_i32_0 : i32, i32
  }
  func.func @transform_5(%arg0: i32) -> (i32, i32, i32) {
    %c0_i32 = arith.constant 0 : i32
    %c0_i32_0 = arith.constant 0 : i32
    %c0_i32_1 = arith.constant 0 : i32
    return %arg0, %c0_i32, %c0_i32_0 : i32, i32, i32
  }
  func.func @transform_6(%arg0: i32) -> (i32, i32, i32) {
    %c0_i32 = arith.constant 0 : i32
    %c0_i32_0 = arith.constant 0 : i32
    %c0_i32_1 = arith.constant 0 : i32
    return %arg0, %c0_i32, %c0_i32_0 : i32, i32, i32
  }
}

module attributes {stable_mosaic.version = 11 : i64} {
  func.func @kernel(%arg0: i32, %arg1: memref<1x16x128xf32, #tpu.memory_space<vmem>>, %arg2: memref<1x16x64xf32, #tpu.memory_space<vmem>>, %arg3: memref<64x128xf32, #tpu.memory_space<vmem>>, %arg4: memref<1x128xf32, #tpu.memory_space<vmem>>, %arg5: memref<1x128xf32, #tpu.memory_space<vmem>>, %arg6: memref<1x128xf32, #tpu.memory_space<vmem>>, %arg7: memref<1x16x128xf32, #tpu.memory_space<vmem>>) attributes {dimension_semantics = [#tpu.dimension_semantics<parallel>], iteration_bounds = array<i64: 2>, scalar_prefetch = 0 : i64, scratch_operands = 0 : i64, tpu.core_type = #tpu.core_type<tc>, window_params = [{transform_indices = @transform_0, window_bounds = array<i64: 1, 16, 128>}, {transform_indices = @transform_1, window_bounds = array<i64: 1, 16, 64>}, {pipeline_mode = #tpu.pipeline_mode<synchronous>, transform_indices = @transform_2, window_bounds = array<i64: 64, 128>}, {pipeline_mode = #tpu.pipeline_mode<synchronous>, transform_indices = @transform_3, window_bounds = array<i64: 1, 128>}, {pipeline_mode = #tpu.pipeline_mode<synchronous>, transform_indices = @transform_4, window_bounds = array<i64: 1, 128>}, {pipeline_mode = #tpu.pipeline_mode<synchronous>, transform_indices = @transform_5, window_bounds = array<i64: 1, 128>}, {transform_indices = @transform_6, window_bounds = array<i64: 1, 16, 128>}]} {
    %c0 = arith.constant 0 : index
    %c0_0 = arith.constant 0 : index
    %c0_1 = arith.constant 0 : index
    %0 = vector.load %arg2[%c0, %c0_0, %c0_1] : memref<1x16x64xf32, #tpu.memory_space<vmem>>, vector<1x16x64xf32>
    %1 = vector.shape_cast %0 : vector<1x16x64xf32> to vector<16x64xf32>
    %c0_2 = arith.constant 0 : index
    %c0_3 = arith.constant 0 : index
    %2 = vector.load %arg3[%c0_2, %c0_3] : memref<64x128xf32, #tpu.memory_space<vmem>>, vector<64x128xf32>
    %cst = arith.constant dense<0.000000e+00> : vector<16x128xf32>
    %3 = tpu.matmul %1, %2, %cst {dimension_numbers = #tpu.dot_dimension_numbers<[1], [0], [0], [1], [0, 0, 1, 1], [], []>} : vector<16x64xf32>, vector<64x128xf32>, vector<16x128xf32> -> vector<16x128xf32>
    %c0_4 = arith.constant 0 : index
    %c0_5 = arith.constant 0 : index
    %c0_6 = arith.constant 0 : index
    %4 = vector.load %arg1[%c0_4, %c0_5, %c0_6] : memref<1x16x128xf32, #tpu.memory_space<vmem>>, vector<1x16x128xf32>
    %5 = vector.shape_cast %4 : vector<1x16x128xf32> to vector<16x128xf32>
    %c0_7 = arith.constant 0 : index
    %c0_8 = arith.constant 0 : index
    %6 = vector.load %arg4[%c0_7, %c0_8] : memref<1x128xf32, #tpu.memory_space<vmem>>, vector<1x128xf32>
    %7 = vector.broadcast %6 : vector<1x128xf32> to vector<16x128xf32>
    %8 = arith.mulf %5, %7 : vector<16x128xf32>
    %c0_9 = arith.constant 0 : index
    %c0_10 = arith.constant 0 : index
    %9 = vector.load %arg5[%c0_9, %c0_10] : memref<1x128xf32, #tpu.memory_space<vmem>>, vector<1x128xf32>
    %10 = vector.broadcast %9 : vector<1x128xf32> to vector<16x128xf32>
    %11 = arith.mulf %3, %10 : vector<16x128xf32>
    %12 = arith.addf %8, %11 : vector<16x128xf32>
    %c0_11 = arith.constant 0 : index
    %c0_12 = arith.constant 0 : index
    %13 = vector.load %arg6[%c0_11, %c0_12] : memref<1x128xf32, #tpu.memory_space<vmem>>, vector<1x128xf32>
    %14 = vector.broadcast %13 : vector<1x128xf32> to vector<16x128xf32>
    %15 = arith.addf %12, %14 : vector<16x128xf32>
    %cst_13 = arith.constant 0.000000e+00 : f32
    %16 = vector.broadcast %cst_13 : f32 to vector<16x128xf32>
    %17 = arith.maximumf %15, %16 : vector<16x128xf32>
    %c0_14 = arith.constant 0 : index
    %c0_15 = arith.constant 0 : index
    %c0_16 = arith.constant 0 : index
    %18 = vector.load %arg7[%c0_14, %c0_15, %c0_16] : memref<1x16x128xf32, #tpu.memory_space<vmem>>, vector<1x16x128xf32>
    %19 = vector.shape_cast %18 : vector<1x16x128xf32> to vector<16x128xf32>
    %20 = vector.shape_cast %17 : vector<16x128xf32> to vector<1x16x128xf32>
    tpu.vector_store %arg7[%c0_14, %c0_15, %c0_16], %20 {strides = array<i32>} : memref<1x16x128xf32, #tpu.memory_space<vmem>>, vector<1x16x128xf32>,
    return
  }
  func.func @transform_0(%arg0: i32) -> (i32, i32, i32) {
    %c0_i32 = arith.constant 0 : i32
    %c0_i32_0 = arith.constant 0 : i32
    %c0_i32_1 = arith.constant 0 : i32
    return %arg0, %c0_i32, %c0_i32_0 : i32, i32, i32
  }
  func.func @transform_1(%arg0: i32) -> (i32, i32, i32) {
    %c0_i32 = arith.constant 0 : i32
    %c0_i32_0 = arith.constant 0 : i32
    %c0_i32_1 = arith.constant 0 : i32
    return %arg0, %c0_i32, %c0_i32_0 : i32, i32, i32
  }
  func.func @transform_2(%arg0: i32) -> (i32, i32) {
    %c0_i32 = arith.constant 0 : i32
    %c0_i32_0 = arith.constant 0 : i32
    %c0_i32_1 = arith.constant 0 : i32
    return %c0_i32, %c0_i32_0 : i32, i32
  }
  func.func @transform_3(%arg0: i32) -> (i32, i32) {
    %c0_i32 = arith.constant 0 : i32
    %c0_i32_0 = arith.constant 0 : i32
    %c0_i32_1 = arith.constant 0 : i32
    return %c0_i32, %c0_i32_0 : i32, i32
  }
  func.func @transform_4(%arg0: i32) -> (i32, i32) {
    %c0_i32 = arith.constant 0 : i32
    %c0_i32_0 = arith.constant 0 : i32
    %c0_i32_1 = arith.constant 0 : i32
    return %c0_i32, %c0_i32_0 : i32, i32
  }
  func.func @transform_5(%arg0: i32) -> (i32, i32) {
    %c0_i32 = arith.constant 0 : i32
    %c0_i32_0 = arith.constant 0 : i32
    %c0_i32_1 = arith.constant 0 : i32
    return %c0_i32, %c0_i32_0 : i32, i32
  }
  func.func @transform_6(%arg0: i32) -> (i32, i32, i32) {
    %c0_i32 = arith.constant 0 : i32
    %c0_i32_0 = arith.constant 0 : i32
    %c0_i32_1 = arith.constant 0 : i32
    return %arg0, %c0_i32, %c0_i32_0 : i32, i32, i32
  }
}

</mosaic_0001>

<llo_original>
// kernel: dilated_res_block.5
$region0: #{dilated_res_block.5}
  #allocation0 [shape = 'u32[]', space=smem, size = 0x4, offset = 0x4, fixed_abs, tag = 'smem constant byte address 0x4 - core index']
  #allocation1 [shape = 'u32[144,128]{1,0:T(1,128)}', space=vmem, size = 0x12000, scoped, tag = 'internal scratch']
  %s0 = inlined_call_operand.vmem [shape: f32[2,16,128], index: 0, kind: input, shape index: {}]
  %s1 = inlined_call_operand.vmem [shape: f32[2,16,64], index: 1, kind: input, shape index: {}]
  %s2 = inlined_call_operand.vmem [shape: f32[64,128], index: 2, kind: input, shape index: {}]
  %s3 = inlined_call_operand.vmem [shape: f32[1,128], index: 3, kind: input, shape index: {}]
  %s4 = inlined_call_operand.vmem [shape: f32[1,128], index: 4, kind: input, shape index: {}]
  %s5 = inlined_call_operand.vmem [shape: f32[1,128], index: 5, kind: input, shape index: {}]
  %s6 = inlined_call_operand.vmem [shape: f32[2,16,128], index: 6, kind: output, shape index: {}]
  %s7 = sld [smem:[#allocation0]]
  $region57: #{dilated_res_block.5} parent=0
    _
  %s9 = ssub.s32 1, %s7
  %s10 = scalar_select 0, %s9, %s7
  loop: start=0, step=1, limit=4
  $region2: #{dilated_res_block.5} parent=0 // loop_pre_header
    _
  $region3: #{dilated_res_block.5} parent=0 // loop_header
    %s12 = sphi 0, %s16
    %p13 = scmp.ge.s32.totalorder %s12, 4
    %s22 = sphi 0, %s24
    %s25 = sphi 0, %s22
    %s26 = sphi 0, %s25
    %s42 = sphi 0, %s26
    %s48 = sphi 0, %s50
    %s51 = sphi 0, %s48
    %s52 = sphi 0, %s51
    %s68 = sphi 0, %s52
    %s72 = sphi 0, %s72
    %s74 = sphi 0, %s72
    %s75 = sphi 0, %s74
    %s89 = sphi 0, %s75
    %s93 = sphi 0, %s93
    %s95 = sphi 0, %s93
    %s96 = sphi 0, %s95
    %s110 = sphi 0, %s96
    %s114 = sphi 0, %s114
    %s116 = sphi 0, %s114
    %s117 = sphi 0, %s116
    %s131 = sphi 0, %s117
    %s135 = sphi 0, %s135
    %s137 = sphi 0, %s135
    %s138 = sphi 0, %s137
    %s152 = sphi 0, %s138
    %s158 = sphi 0, %s160
    %s161 = sphi 0, %s158
    %s162 = sphi 0, %s161
    %s178 = sphi 0, %s162
  $region4: #{dilated_res_block.5} parent=0 // loop_header_branch
    %15 = sbr.rel (%p13) target = $region8
  $region5: #{dilated_res_block.5} parent=0 // loop_body
    %s17 = ssub.s32 %s12, 1
    %s18 = ssub.s32 %s12, 2
    %s19 = sadd.s32 %s12, 1
    %s20 = ssub.s32 %s12, %s19
    %p21 = scmp.eq.s32.totalorder %s20, 0
    %s23 = sadd.s32 %s22, 1
    %s24 = scalar_select %p21, %s22, %s23
    %p27 = pneg %p21
    %p28 = scmp.eq.s32.totalorder %s12, 1
    %p29 = por %p27, %p28
    %p30 = scmp.ne.s32.totalorder %s22, %s25
    %p31 = scmp.eq.s32.totalorder %s12, 0
    %p32 = por %p30, %p31
    %p33 = scmp.ne.s32.totalorder %s22, %s25
    %p34 = scmp.eq.s32.totalorder %s17, 1
    %p35 = por %p33, %p34
    %p36 = scmp.ne.s32.totalorder %s25, %s26
    %p37 = scmp.eq.s32.totalorder %s17, 0
    %p38 = por %p36, %p37
    %p39 = scmp.ne.s32.totalorder %s25, %s26
    %p40 = scmp.eq.s32.totalorder %s18, 1
    %p41 = por %p39, %p40
    %p43 = scmp.ne.s32.totalorder %s26, %s42
    %p44 = scmp.eq.s32.totalorder %s18, 0
    %p45 = por %p43, %p44
    %s46 = ssub.s32 %s12, %s19
    %p47 = scmp.eq.s32.totalorder %s46, 0
    %s49 = sadd.s32 %s48, 1
    %s50 = scalar_select %p47, %s48, %s49
    %p53 = pneg %p47
    %p54 = scmp.eq.s32.totalorder %s12, 1
    %p55 = por %p53, %p54
    %p56 = scmp.ne.s32.totalorder %s48, %s51
    %p57 = scmp.eq.s32.totalorder %s12, 0
    %p58 = por %p56, %p57
    %p59 = scmp.ne.s32.totalorder %s48, %s51
    %p60 = scmp.eq.s32.totalorder %s17, 1
    %p61 = por %p59, %p60
    %p62 = scmp.ne.s32.totalorder %s51, %s52
    %p63 = scmp.eq.s32.totalorder %s17, 0
    %p64 = por %p62, %p63
    %p65 = scmp.ne.s32.totalorder %s51, %s52
    %p66 = scmp.eq.s32.totalorder %s18, 1
    %p67 = por %p65, %p66
    %p69 = scmp.ne.s32.totalorder %s52, %s68
    %p70 = scmp.eq.s32.totalorder %s18, 0
    %p71 = por %p69, %p70
    %s73 = sadd.s32 %s72, 1
    %p76 = scmp.eq.s32.totalorder %s12, 1
    %p77 = scmp.ne.s32.totalorder %s72, %s74
    %p78 = scmp.eq.s32.totalorder %s12, 0
    %p79 = por %p77, %p78
    %p80 = scmp.ne.s32.totalorder %s72, %s74
    %p81 = scmp.eq.s32.totalorder %s17, 1
    %p82 = por %p80, %p81
    %p83 = scmp.ne.s32.totalorder %s74, %s75
    %p84 = scmp.eq.s32.totalorder %s17, 0
    %p85 = por %p83, %p84
    %p86 = scmp.ne.s32.totalorder %s74, %s75
    %p87 = scmp.eq.s32.totalorder %s18, 1
    %p88 = por %p86, %p87
    %p90 = scmp.ne.s32.totalorder %s75, %s89
    %p91 = scmp.eq.s32.totalorder %s18, 0
    %p92 = por %p90, %p91
    %s94 = sadd.s32 %s93, 1
    %p97 = scmp.eq.s32.totalorder %s12, 1
    %p98 = scmp.ne.s32.totalorder %s93, %s95
    %p99 = scmp.eq.s32.totalorder %s12, 0
    %p100 = por %p98, %p99
    %p101 = scmp.ne.s32.totalorder %s93, %s95
    %p102 = scmp.eq.s32.totalorder %s17, 1
    %p103 = por %p101, %p102
    %p104 = scmp.ne.s32.totalorder %s95, %s96
    %p105 = scmp.eq.s32.totalorder %s17, 0
    %p106 = por %p104, %p105
    %p107 = scmp.ne.s32.totalorder %s95, %s96
    %p108 = scmp.eq.s32.totalorder %s18, 1
    %p109 = por %p107, %p108
    %p111 = scmp.ne.s32.totalorder %s96, %s110
    %p112 = scmp.eq.s32.totalorder %s18, 0
    %p113 = por %p111, %p112
    %s115 = sadd.s32 %s114, 1
    %p118 = scmp.eq.s32.totalorder %s12, 1
    %p119 = scmp.ne.s32.totalorder %s114, %s116
    %p120 = scmp.eq.s32.totalorder %s12, 0
    %p121 = por %p119, %p120
    %p122 = scmp.ne.s32.totalorder %s114, %s116
    %p123 = scmp.eq.s32.totalorder %s17, 1
    %p124 = por %p122, %p123
    %p125 = scmp.ne.s32.totalorder %s116, %s117
    %p126 = scmp.eq.s32.totalorder %s17, 0
    %p127 = por %p125, %p126
    %p128 = scmp.ne.s32.totalorder %s116, %s117
    %p129 = scmp.eq.s32.totalorder %s18, 1
    %p130 = por %p128, %p129
    %p132 = scmp.ne.s32.totalorder %s117, %s131
    %p133 = scmp.eq.s32.totalorder %s18, 0
    %p134 = por %p132, %p133
    %s136 = sadd.s32 %s135, 1
    %p139 = scmp.eq.s32.totalorder %s12, 1
    %p140 = scmp.ne.s32.totalorder %s135, %s137
    %p141 = scmp.eq.s32.totalorder %s12, 0
    %p142 = por %p140, %p141
    %p143 = scmp.ne.s32.totalorder %s135, %s137
    %p144 = scmp.eq.s32.totalorder %s17, 1
    %p145 = por %p143, %p144
    %p146 = scmp.ne.s32.totalorder %s137, %s138
    %p147 = scmp.eq.s32.totalorder %s17, 0
    %p148 = por %p146, %p147
    %p149 = scmp.ne.s32.totalorder %s137, %s138
    %p150 = scmp.eq.s32.totalorder %s18, 1
    %p151 = por %p149, %p150
    %p153 = scmp.ne.s32.totalorder %s138, %s152
    %p154 = scmp.eq.s32.totalorder %s18, 0
    %p155 = por %p153, %p154
    %s156 = ssub.s32 %s12, %s19
    %p157 = scmp.eq.s32.totalorder %s156, 0
    %s159 = sadd.s32 %s158, 1
    %s160 = scalar_select %p157, %s158, %s159
    %p163 = pneg %p157
    %p164 = scmp.eq.s32.totalorder %s12, 1
    %p165 = por %p163, %p164
    %p166 = scmp.ne.s32.totalorder %s158, %s161
    %p167 = scmp.eq.s32.totalorder %s12, 0
    %p168 = por %p166, %p167
    %p169 = scmp.ne.s32.totalorder %s158, %s161
    %p170 = scmp.eq.s32.totalorder %s17, 1
    %p171 = por %p169, %p170
    %p172 = scmp.ne.s32.totalorder %s161, %s162
    %p173 = scmp.eq.s32.totalorder %s17, 0
    %p174 = por %p172, %p173
    %p175 = scmp.ne.s32.totalorder %s161, %s162
    %p176 = scmp.eq.s32.totalorder %s18, 1
    %p177 = por %p175, %p176
    %p179 = scmp.ne.s32.totalorder %s162, %s178
    %p180 = scmp.eq.s32.totalorder %s18, 0
    %p181 = por %p179, %p180
    %p182 = scmp.le.s32.totalorder 1, %s12
    %p183 = scmp.lt.s32.totalorder %s12, 3
    %p184 = pnand %p182, %p183
    %p185 = pneg %p184
    // Predicated region
    $region9: #{dilated_res_block.5} parent=5 // pred_check
      _
    $region10: #{dilated_res_block.5} parent=5 // pred_check_branch
      %187 = sbr.rel (%p184) target = $region12
    $region11: #{dilated_res_block.5} parent=5 // pred_region
      %s188 = ssub.s32 %s12, 1
      // Predicated region
      $region13: #{dilated_res_block.5} parent=11 // pred_check
        %p189 = pneg %p85
      $region14: #{dilated_res_block.5} parent=11 // pred_check_branch
        %191 = sbr.rel (%p189) target = $region16
      $region15: #{dilated_res_block.5} parent=11 // pred_region
        _
      $region16: #{dilated_res_block.5} parent=11 // pred_fallthru
        _
      // Predicated region
      $region17: #{dilated_res_block.5} parent=11 // pred_check
        %p192 = pneg %p106
      $region18: #{dilated_res_block.5} parent=11 // pred_check_branch
        %194 = sbr.rel (%p192) target = $region20
      $region19: #{dilated_res_block.5} parent=11 // pred_region
        _
      $region20: #{dilated_res_block.5} parent=11 // pred_fallthru
        _
      // Predicated region
      $region21: #{dilated_res_block.5} parent=11 // pred_check
        %p195 = pneg %p127
      $region22: #{dilated_res_block.5} parent=11 // pred_check_branch
        %197 = sbr.rel (%p195) target = $region24
      $region23: #{dilated_res_block.5} parent=11 // pred_region
        _
      $region24: #{dilated_res_block.5} parent=11 // pred_fallthru
        _
      // Predicated region
      $region25: #{dilated_res_block.5} parent=11 // pred_check
        %p198 = pneg %p148
      $region26: #{dilated_res_block.5} parent=11 // pred_check_branch
        %200 = sbr.rel (%p198) target = $region28
      $region27: #{dilated_res_block.5} parent=11 // pred_region
        _
      $region28: #{dilated_res_block.5} parent=11 // pred_fallthru
        _
    $region12: #{dilated_res_block.5} parent=5 // pred_fallthru
      _
    %p201 = scmp.lt.s32.totalorder %s12, 2
    // Predicated region
    $region29: #{dilated_res_block.5} parent=5 // pred_check
      %p202 = pneg %p201
    $region30: #{dilated_res_block.5} parent=5 // pred_check_branch
      %204 = sbr.rel (%p202) target = $region32
    $region31: #{dilated_res_block.5} parent=5 // pred_region
      // Predicated region
      $region33: #{dilated_res_block.5} parent=31 // pred_check
        %p205 = pneg %p32
      $region34: #{dilated_res_block.5} parent=31 // pred_check_branch
        %207 = sbr.rel (%p205) target = $region36
      $region35: #{dilated_res_block.5} parent=31 // pred_region
        %p208 = scmp.lt.s32.totalorder %s12, 1
        %s209 = scalar_select %p208, %s12, 1
        %s210 = smul.addr %s209, 2
        %s211 = smul.addr %s210, 8
        %s212 = scalar_lea.vmem %s0, %s211
      $region36: #{dilated_res_block.5} parent=31 // pred_fallthru
        _
      // Predicated region
      $region37: #{dilated_res_block.5} parent=31 // pred_check
        %p213 = pneg %p58
      $region38: #{dilated_res_block.5} parent=31 // pred_check_branch
        %215 = sbr.rel (%p213) target = $region40
      $region39: #{dilated_res_block.5} parent=31 // pred_region
        %p216 = scmp.lt.s32.totalorder %s12, 1
        %s217 = scalar_select %p216, %s12, 1
        %s218 = smul.addr %s217, 2
        %s219 = smul.addr %s218, 8
        %s220 = scalar_lea.vmem %s1, %s219
      $region40: #{dilated_res_block.5} parent=31 // pred_fallthru
        _
    $region32: #{dilated_res_block.5} parent=5 // pred_fallthru
      _
    %p221 = scmp.le.s32.totalorder 1, %s12
    %p222 = scmp.lt.s32.totalorder %s12, 3
    %p223 = pnand %p221, %p222
    %p224 = pneg %p223
    // Predicated region
    $region41: #{dilated_res_block.5} parent=5 // pred_check
      _
    $region42: #{dilated_res_block.5} parent=5 // pred_check_branch
      %226 = sbr.rel (%p223) target = $region44
    $region43: #{dilated_res_block.5} parent=5 // pred_region
      %s227 = ssub.s32 %s12, 1
      %p228 = scmp.lt.s32.totalorder %s17, 1
      %s229 = scalar_select %p228, %s17, 1
      %s230 = smul.addr %s229, 2
      %s231 = smul.addr %s230, 8
      %s232 = scalar_lea.vmem %s0, %s231
      %p233 = pneg %p38
      %p234 = pneg %p35
      %p235 = scmp.lt.s32.totalorder %s17, 1
      %s236 = scalar_select %p235, %s17, 1
      %s237 = smul.addr %s236, 2
      %s238 = smul.addr %s237, 8
      %s239 = scalar_lea.vmem %s1, %s238
      %p240 = pneg %p64
      %p241 = pneg %p61
      %p242 = pneg %p85
      %p243 = pneg %p82
      %p244 = pneg %p106
      %p245 = pneg %p103
      %p246 = pneg %p127
      %p247 = pneg %p124
      %p248 = pneg %p148
      %p249 = pneg %p145
      %p250 = pneg %p174
      %p251 = pneg %p171
      %p252 = scmp.lt.s32.totalorder %s17, 1
      %s253 = scalar_select %p252, %s17, 1
      %s254 = smul.addr %s253, 2
      %s255 = smul.addr %s254, 8
      %s256 = scalar_lea.vmem %s6, %s255
      %p257 = scmp.lt.s32.totalorder %s17, 1
      %s258 = scalar_select %p257, %s17, 1
      %s259 = smul.addr %s258, 2
      %s260 = smul.addr %s259, 8
      %s261 = scalar_lea.vmem %s0, %s260
      %p262 = scmp.lt.s32.totalorder %s17, 1
      %s263 = scalar_select %p262, %s17, 1
      %s264 = smul.addr %s263, 2
      %s265 = smul.addr %s264, 8
      %s266 = scalar_lea.vmem %s1, %s265
      %p267 = scmp.lt.s32.totalorder %s17, 1
      %s268 = scalar_select %p267, %s17, 1
      %s269 = smul.addr %s268, 2
      %s270 = smul.addr %s269, 8
      %s271 = scalar_lea.vmem %s6, %s270
      %v272 = vld [vmem:[%s266] sm:$0xff]
      %v273 = vld [vmem:[%s266 + $0x8] sm:$0xff]
      %v274 = vld [vmem:[%s2] sm:$0xff]
      %v275 = vld [vmem:[%s2 + $0x8] sm:$0xff]
      %v276 = vld [vmem:[%s2 + $0x10] sm:$0xff]
      %v277 = vld [vmem:[%s2 + $0x18] sm:$0xff]
      %v278 = vld [vmem:[%s2 + $0x20] sm:$0xff]
      %v279 = vld [vmem:[%s2 + $0x28] sm:$0xff]
      %v280 = vld [vmem:[%s2 + $0x30] sm:$0xff]
      %v281 = vld [vmem:[%s2 + $0x38] sm:$0xff]
      %vm282 = vcmask 523264
      %v284 = vsel %vm282, %v272, 0
      %v287 = vsel %vm282, %v273, 0
      %289 = vmatprep.subr.mxu0 0.0
      %290 = vmatpush1.msra.mxu0 0.0
      %291 = vmatprep.subr.mxu0 0.0
      %292 = vmatpush1.msra.mxu0 0.0
      %293 = vmatprep.subr.mxu0 0.0
      %294 = vmatpush1.msra.mxu0 0.0
      %295 = vmatprep.subr.mxu0 0.0
      %296 = vmatpush1.msra.mxu0 0.0
      %297 = vmatprep.subr.mxu0 0.0
      %298 = vmatpush1.msra.mxu0 0.0
      %299 = vmatprep.subr.mxu0 0.0
      %300 = vmatpush1.msra.mxu0 0.0
      %301 = vmatprep.subr.mxu0 0.0
      %302 = vmatpush1.msra.mxu0 0.0
      %303 = vmatprep.subr.mxu0 0.0
      %304 = vmatpush1.msra.mxu0 0.0
      %305 = vmatprep.subr.mxu0 0.0
      %306 = vmatpush1.msra.mxu0 %v281
      %307 = vmatprep.subr.mxu0 0.0
      %308 = vmatpush1.msra.mxu0 %v280
      %309 = vmatprep.subr.mxu0 0.0
      %310 = vmatpush1.msra.mxu0 %v279
      %311 = vmatprep.subr.mxu0 0.0
      %312 = vmatpush1.msra.mxu0 %v278
      %313 = vmatprep.subr.mxu0 0.0
      %314 = vmatpush1.msra.mxu0 %v277
      %315 = vmatprep.subr.mxu0 0.0
      %316 = vmatpush1.msra.mxu0 %v276
      %317 = vmatprep.subr.mxu0 0.0
      %318 = vmatpush1.msra.mxu0 %v275
      %319 = vmatprep.subr.mxu0 0.0
      %320 = vmatpush1.msra.mxu0 %v274
      %321 = vmatprep.subr.mxu0 0.0
      %322 = vmatpush2.msra.mxu0 0.0
      %323 = vmatprep.subr.mxu0 0.0
      %324 = vmatpush2.msra.mxu0 0.0
      %325 = vmatprep.subr.mxu0 0.0
      %326 = vmatpush2.msra.mxu0 0.0
      %327 = vmatprep.subr.mxu0 0.0
      %328 = vmatpush2.msra.mxu0 0.0
      %329 = vmatprep.subr.mxu0 0.0
      %330 = vmatpush2.msra.mxu0 0.0
      %331 = vmatprep.subr.mxu0 0.0
      %332 = vmatpush2.msra.mxu0 0.0
      %333 = vmatprep.subr.mxu0 0.0
      %334 = vmatpush2.msra.mxu0 0.0
      %335 = vmatprep.subr.mxu0 0.0
      %336 = vmatpush2.msra.mxu0 0.0
      %337 = vmatprep.subr.mxu0 0.0
      %338 = vmatpush2.msra.mxu0 0.0
      %339 = vmatprep.subr.mxu0 0.0
      %340 = vmatpush2.msra.mxu0 0.0
      %341 = vmatprep.subr.mxu0 0.0
      %342 = vmatpush2.msra.mxu0 0.0
      %343 = vmatprep.subr.mxu0 0.0
      %344 = vmatpush2.msra.mxu0 0.0
      %345 = vmatprep.subr.mxu0 0.0
      %346 = vmatpush2.msra.mxu0 0.0
      %347 = vmatprep.subr.mxu0 0.0
      %348 = vmatpush2.msra.mxu0 0.0
      %349 = vmatprep.subr.mxu0 0.0
      %350 = vmatpush2.msra.mxu0 0.0
      %351 = vmatprep.subr.mxu0 0.0
      %352 = vmatpush2.msra.mxu0 0.0
      %353 = vmatprep.mubr.f32.mxu0 0.0
      %354 = vmatmul.mubr.f32.gmra.mxu0 %v284
      %v355 = vpop.f32.mrf.mxu0
      %v356 = vadd.f32 0.0, %v355
      %v357 = vpop.f32.mrf.mxu0
      %358 = vmatprep.mubr.f32.mxu0 0.0
      %359 = vmatmul.mubr.f32.gmra.mxu0 %v287
      %v360 = vpop.f32.mrf.mxu0
      %v361 = vadd.f32 0.0, %v360
      %v362 = vpop.f32.mrf.mxu0
      %363 = vdwg.mxu0
      %v364 = vld [vmem:[%s261] sm:$0xff]
      %v365 = vld [vmem:[%s261 + $0x8] sm:$0xff]
      %v366 = vld [vmem:[%s3] sm:$0x1]
      %v368 = vlaneseq
      %v369 = vshrl.u32 %v368, 7
      %v370 = vsub.s32 0, %v369
      %v371 = vrot.slane %v366, %v370
      %v373 = vmul.f32 %v364, %v371
      %v374 = vmul.f32 %v365, %v371
      %v375 = vld [vmem:[%s4] sm:$0x1]
      %v377 = vlaneseq
      %v378 = vshrl.u32 %v377, 7
      %v379 = vsub.s32 0, %v378
      %v380 = vrot.slane %v375, %v379
      %v382 = vmul.f32 %v356, %v380
      %v383 = vmul.f32 %v361, %v380
      %v384 = vadd.f32 %v373, %v382
      %v385 = vadd.f32 %v374, %v383
      %v386 = vld [vmem:[%s5] sm:$0x1]
      %v388 = vlaneseq
      %v389 = vshrl.u32 %v388, 7
      %v390 = vsub.s32 0, %v389
      %v391 = vrot.slane %v386, %v390
      %v393 = vadd.f32 %v384, %v391
      %v394 = vadd.f32 %v385, %v391
      %v395 = vmax.f32 %v393, 0.0
      %v396 = vmax.f32 %v394, 0.0
      %397 = vst [vmem:[%s271] sm:$0xff] %v395
      %398 = vst [vmem:[%s271 + $0x8] sm:$0xff] %v396
      %p399 = scmp.lt.s32.totalorder %s17, 1
      %s400 = scalar_select %p399, %s17, 1
      %s401 = smul.addr %s400, 2
      %s402 = smul.addr %s401, 8
      %s403 = scalar_lea.vmem %s6, %s402
      // Predicated region
      $region45: #{dilated_res_block.5} parent=43 // pred_check
        %p404 = pneg %p171
      $region46: #{dilated_res_block.5} parent=43 // pred_check_branch
        %406 = sbr.rel (%p404) target = $region48
      $region47: #{dilated_res_block.5} parent=43 // pred_region
        _
      $region48: #{dilated_res_block.5} parent=43 // pred_fallthru
        _
    $region44: #{dilated_res_block.5} parent=5 // pred_fallthru
      _
    %p407 = scmp.le.s32.totalorder 2, %s12
    // Predicated region
    $region49: #{dilated_res_block.5} parent=5 // pred_check
      %p408 = pneg %p407
    $region50: #{dilated_res_block.5} parent=5 // pred_check_branch
      %410 = sbr.rel (%p408) target = $region52
    $region51: #{dilated_res_block.5} parent=5 // pred_region
      %s411 = ssub.s32 %s12, 2
      // Predicated region
      $region53: #{dilated_res_block.5} parent=51 // pred_check
        %p412 = pneg %p177
      $region54: #{dilated_res_block.5} parent=51 // pred_check_branch
        %414 = sbr.rel (%p412) target = $region56
      $region55: #{dilated_res_block.5} parent=51 // pred_region
        %p415 = scmp.lt.s32.totalorder %s18, 1
        %s416 = scalar_select %p415, %s18, 1
        %s417 = smul.addr %s416, 2
        %s418 = smul.addr %s417, 8
        %s419 = scalar_lea.vmem %s6, %s418
      $region56: #{dilated_res_block.5} parent=51 // pred_fallthru
        _
    $region52: #{dilated_res_block.5} parent=5 // pred_fallthru
      _
  $region6: #{dilated_res_block.5} parent=0 // loop_footer
    %s16 = sadd.s32 1, %s12
  $region7: #{dilated_res_block.5} parent=0 // loop_footer_branch
    %11 = sbr.rel target = $region3
  $region8: #{dilated_res_block.5} parent=0 // loop_exit
    _

// kernel: dilated_res_block.4
$region0: #{dilated_res_block.4}
  #allocation0 [shape = 'u32[]', space=smem, size = 0x4, offset = 0x4, fixed_abs, tag = 'smem constant byte address 0x4 - core index']
  #allocation1 [shape = 'u32[144,128]{1,0:T(1,128)}', space=vmem, size = 0x12000, scoped, tag = 'internal scratch']
  #allocation2 [shape = 'f32[20,128]{1,0:T(8,128)}', space=vmem, size = 0x3000, scoped, tag = 'scratch operand']
  %s0 = inlined_call_operand.vmem [shape: f32[2,16,128], index: 0, kind: input, shape index: {}]
  %s1 = inlined_call_operand.vmem [shape: f32[3,128,128], index: 1, kind: input, shape index: {}]
  %s2 = inlined_call_operand.vmem [shape: f32[1,128], index: 2, kind: input, shape index: {}]
  %s3 = inlined_call_operand.vmem [shape: f32[1,128], index: 3, kind: input, shape index: {}]
  %s4 = inlined_call_operand.vmem [shape: f32[128,8], index: 4, kind: input, shape index: {}]
  %s5 = inlined_call_operand.vmem [shape: f32[2,16,128], index: 5, kind: output, shape index: {0}]
  %s6 = inlined_call_operand.vmem [shape: f32[2,2,8], index: 6, kind: output, shape index: {1}]
  %7 = xla_tuple %s5, %s6
  %s8 = sld [smem:[#allocation0]]
  $region61: #{dilated_res_block.4} parent=0
    _
  %s10 = ssub.s32 1, %s8
  %s11 = scalar_select 0, %s10, %s8
  loop: start=0, step=1, limit=4
  $region2: #{dilated_res_block.4} parent=0 // loop_pre_header
    _
  $region3: #{dilated_res_block.4} parent=0 // loop_header
    %s13 = sphi 0, %s17
    %p14 = scmp.ge.s32.totalorder %s13, 4
    %s23 = sphi 0, %s25
    %s26 = sphi 0, %s23
    %s27 = sphi 0, %s26
    %s43 = sphi 0, %s27
    %s47 = sphi 0, %s47
    %s49 = sphi 0, %s47
    %s50 = sphi 0, %s49
    %s64 = sphi 0, %s50
    %s68 = sphi 0, %s68
    %s70 = sphi 0, %s68
    %s71 = sphi 0, %s70
    %s85 = sphi 0, %s71
    %s89 = sphi 0, %s89
    %s91 = sphi 0, %s89
    %s92 = sphi 0, %s91
    %s106 = sphi 0, %s92
    %s110 = sphi 0, %s110
    %s112 = sphi 0, %s110
    %s113 = sphi 0, %s112
    %s127 = sphi 0, %s113
    %s133 = sphi 0, %s135
    %s136 = sphi 0, %s133
    %s137 = sphi 0, %s136
    %s153 = sphi 0, %s137
    %s159 = sphi 0, %s161
    %s162 = sphi 0, %s159
    %s163 = sphi 0, %s162
    %s179 = sphi 0, %s163
  $region4: #{dilated_res_block.4} parent=0 // loop_header_branch
    %16 = sbr.rel (%p14) target = $region8
  $region5: #{dilated_res_block.4} parent=0 // loop_body
    %s18 = ssub.s32 %s13, 1
    %s19 = ssub.s32 %s13, 2
    %s20 = sadd.s32 %s13, 1
    %s21 = ssub.s32 %s13, %s20
    %p22 = scmp.eq.s32.totalorder %s21, 0
    %s24 = sadd.s32 %s23, 1
    %s25 = scalar_select %p22, %s23, %s24
    %p28 = pneg %p22
    %p29 = scmp.eq.s32.totalorder %s13, 1
    %p30 = por %p28, %p29
    %p31 = scmp.ne.s32.totalorder %s23, %s26
    %p32 = scmp.eq.s32.totalorder %s13, 0
    %p33 = por %p31, %p32
    %p34 = scmp.ne.s32.totalorder %s23, %s26
    %p35 = scmp.eq.s32.totalorder %s18, 1
    %p36 = por %p34, %p35
    %p37 = scmp.ne.s32.totalorder %s26, %s27
    %p38 = scmp.eq.s32.totalorder %s18, 0
    %p39 = por %p37, %p38
    %p40 = scmp.ne.s32.totalorder %s26, %s27
    %p41 = scmp.eq.s32.totalorder %s19, 1
    %p42 = por %p40, %p41
    %p44 = scmp.ne.s32.totalorder %s27, %s43
    %p45 = scmp.eq.s32.totalorder %s19, 0
    %p46 = por %p44, %p45
    %s48 = sadd.s32 %s47, 1
    %p51 = scmp.eq.s32.totalorder %s13, 1
    %p52 = scmp.ne.s32.totalorder %s47, %s49
    %p53 = scmp.eq.s32.totalorder %s13, 0
    %p54 = por %p52, %p53
    %p55 = scmp.ne.s32.totalorder %s47, %s49
    %p56 = scmp.eq.s32.totalorder %s18, 1
    %p57 = por %p55, %p56
    %p58 = scmp.ne.s32.totalorder %s49, %s50
    %p59 = scmp.eq.s32.totalorder %s18, 0
    %p60 = por %p58, %p59
    %p61 = scmp.ne.s32.totalorder %s49, %s50
    %p62 = scmp.eq.s32.totalorder %s19, 1
    %p63 = por %p61, %p62
    %p65 = scmp.ne.s32.totalorder %s50, %s64
    %p66 = scmp.eq.s32.totalorder %s19, 0
    %p67 = por %p65, %p66
    %s69 = sadd.s32 %s68, 1
    %p72 = scmp.eq.s32.totalorder %s13, 1
    %p73 = scmp.ne.s32.totalorder %s68, %s70
    %p74 = scmp.eq.s32.totalorder %s13, 0
    %p75 = por %p73, %p74
    %p76 = scmp.ne.s32.totalorder %s68, %s70
    %p77 = scmp.eq.s32.totalorder %s18, 1
    %p78 = por %p76, %p77
    %p79 = scmp.ne.s32.totalorder %s70, %s71
    %p80 = scmp.eq.s32.totalorder %s18, 0
    %p81 = por %p79, %p80
    %p82 = scmp.ne.s32.totalorder %s70, %s71
    %p83 = scmp.eq.s32.totalorder %s19, 1
    %p84 = por %p82, %p83
    %p86 = scmp.ne.s32.totalorder %s71, %s85
    %p87 = scmp.eq.s32.totalorder %s19, 0
    %p88 = por %p86, %p87
    %s90 = sadd.s32 %s89, 1
    %p93 = scmp.eq.s32.totalorder %s13, 1
    %p94 = scmp.ne.s32.totalorder %s89, %s91
    %p95 = scmp.eq.s32.totalorder %s13, 0
    %p96 = por %p94, %p95
    %p97 = scmp.ne.s32.totalorder %s89, %s91
    %p98 = scmp.eq.s32.totalorder %s18, 1
    %p99 = por %p97, %p98
    %p100 = scmp.ne.s32.totalorder %s91, %s92
    %p101 = scmp.eq.s32.totalorder %s18, 0
    %p102 = por %p100, %p101
    %p103 = scmp.ne.s32.totalorder %s91, %s92
    %p104 = scmp.eq.s32.totalorder %s19, 1
    %p105 = por %p103, %p104
    %p107 = scmp.ne.s32.totalorder %s92, %s106
    %p108 = scmp.eq.s32.totalorder %s19, 0
    %p109 = por %p107, %p108
    %s111 = sadd.s32 %s110, 1
    %p114 = scmp.eq.s32.totalorder %s13, 1
    %p115 = scmp.ne.s32.totalorder %s110, %s112
    %p116 = scmp.eq.s32.totalorder %s13, 0
    %p117 = por %p115, %p116
    %p118 = scmp.ne.s32.totalorder %s110, %s112
    %p119 = scmp.eq.s32.totalorder %s18, 1
    %p120 = por %p118, %p119
    %p121 = scmp.ne.s32.totalorder %s112, %s113
    %p122 = scmp.eq.s32.totalorder %s18, 0
    %p123 = por %p121, %p122
    %p124 = scmp.ne.s32.totalorder %s112, %s113
    %p125 = scmp.eq.s32.totalorder %s19, 1
    %p126 = por %p124, %p125
    %p128 = scmp.ne.s32.totalorder %s113, %s127
    %p129 = scmp.eq.s32.totalorder %s19, 0
    %p130 = por %p128, %p129
    %s131 = ssub.s32 %s13, %s20
    %p132 = scmp.eq.s32.totalorder %s131, 0
    %s134 = sadd.s32 %s133, 1
    %s135 = scalar_select %p132, %s133, %s134
    %p138 = pneg %p132
    %p139 = scmp.eq.s32.totalorder %s13, 1
    %p140 = por %p138, %p139
    %p141 = scmp.ne.s32.totalorder %s133, %s136
    %p142 = scmp.eq.s32.totalorder %s13, 0
    %p143 = por %p141, %p142
    %p144 = scmp.ne.s32.totalorder %s133, %s136
    %p145 = scmp.eq.s32.totalorder %s18, 1
    %p146 = por %p144, %p145
    %p147 = scmp.ne.s32.totalorder %s136, %s137
    %p148 = scmp.eq.s32.totalorder %s18, 0
    %p149 = por %p147, %p148
    %p150 = scmp.ne.s32.totalorder %s136, %s137
    %p151 = scmp.eq.s32.totalorder %s19, 1
    %p152 = por %p150, %p151
    %p154 = scmp.ne.s32.totalorder %s137, %s153
    %p155 = scmp.eq.s32.totalorder %s19, 0
    %p156 = por %p154, %p155
    %s157 = ssub.s32 %s13, %s20
    %p158 = scmp.eq.s32.totalorder %s157, 0
    %s160 = sadd.s32 %s159, 1
    %s161 = scalar_select %p158, %s159, %s160
    %p164 = pneg %p158
    %p165 = scmp.eq.s32.totalorder %s13, 1
    %p166 = por %p164, %p165
    %p167 = scmp.ne.s32.totalorder %s159, %s162
    %p168 = scmp.eq.s32.totalorder %s13, 0
    %p169 = por %p167, %p168
    %p170 = scmp.ne.s32.totalorder %s159, %s162
    %p171 = scmp.eq.s32.totalorder %s18, 1
    %p172 = por %p170, %p171
    %p173 = scmp.ne.s32.totalorder %s162, %s163
    %p174 = scmp.eq.s32.totalorder %s18, 0
    %p175 = por %p173, %p174
    %p176 = scmp.ne.s32.totalorder %s162, %s163
    %p177 = scmp.eq.s32.totalorder %s19, 1
    %p178 = por %p176, %p177
    %p180 = scmp.ne.s32.totalorder %s163, %s179
    %p181 = scmp.eq.s32.totalorder %s19, 0
    %p182 = por %p180, %p181
    %p183 = scmp.le.s32.totalorder 1, %s13
    %p184 = scmp.lt.s32.totalorder %s13, 3
    %p185 = pnand %p183, %p184
    %p186 = pneg %p185
    // Predicated region
    $region9: #{dilated_res_block.4} parent=5 // pred_check
      _
    $region10: #{dilated_res_block.4} parent=5 // pred_check_branch
      %188 = sbr.rel (%p185) target = $region12
    $region11: #{dilated_res_block.4} parent=5 // pred_region
      %s189 = ssub.s32 %s13, 1
      // Predicated region
      $region13: #{dilated_res_block.4} parent=11 // pred_check
        %p190 = pneg %p60
      $region14: #{dilated_res_block.4} parent=11 // pred_check_branch
        %192 = sbr.rel (%p190) target = $region16
      $region15: #{dilated_res_block.4} parent=11 // pred_region
        _
      $region16: #{dilated_res_block.4} parent=11 // pred_fallthru
        _
      // Predicated region
      $region17: #{dilated_res_block.4} parent=11 // pred_check
        %p193 = pneg %p81
      $region18: #{dilated_res_block.4} parent=11 // pred_check_branch
        %195 = sbr.rel (%p193) target = $region20
      $region19: #{dilated_res_block.4} parent=11 // pred_region
        _
      $region20: #{dilated_res_block.4} parent=11 // pred_fallthru
        _
      // Predicated region
      $region21: #{dilated_res_block.4} parent=11 // pred_check
        %p196 = pneg %p102
      $region22: #{dilated_res_block.4} parent=11 // pred_check_branch
        %198 = sbr.rel (%p196) target = $region24
      $region23: #{dilated_res_block.4} parent=11 // pred_region
        _
      $region24: #{dilated_res_block.4} parent=11 // pred_fallthru
        _
      // Predicated region
      $region25: #{dilated_res_block.4} parent=11 // pred_check
        %p199 = pneg %p123
      $region26: #{dilated_res_block.4} parent=11 // pred_check_branch
        %201 = sbr.rel (%p199) target = $region28
      $region27: #{dilated_res_block.4} parent=11 // pred_region
        _
      $region28: #{dilated_res_block.4} parent=11 // pred_fallthru
        _
    $region12: #{dilated_res_block.4} parent=5 // pred_fallthru
      _
    %p202 = scmp.lt.s32.totalorder %s13, 2
    // Predicated region
    $region29: #{dilated_res_block.4} parent=5 // pred_check
      %p203 = pneg %p202
    $region30: #{dilated_res_block.4} parent=5 // pred_check_branch
      %205 = sbr.rel (%p203) target = $region32
    $region31: #{dilated_res_block.4} parent=5 // pred_region
      // Predicated region
      $region33: #{dilated_res_block.4} parent=31 // pred_check
        %p206 = pneg %p33
      $region34: #{dilated_res_block.4} parent=31 // pred_check_branch
        %208 = sbr.rel (%p206) target = $region36
      $region35: #{dilated_res_block.4} parent=31 // pred_region
        %p209 = scmp.lt.s32.totalorder %s13, 1
        %s210 = scalar_select %p209, %s13, 1
        %s211 = smul.addr %s210, 2
        %s212 = smul.addr %s211, 8
        %s213 = scalar_lea.vmem %s0, %s212
      $region36: #{dilated_res_block.4} parent=31 // pred_fallthru
        _
    $region32: #{dilated_res_block.4} parent=5 // pred_fallthru
      _
    %p214 = scmp.le.s32.totalorder 1, %s13
    %p215 = scmp.lt.s32.totalorder %s13, 3
    %p216 = pnand %p214, %p215
    %p217 = pneg %p216
    // Predicated region
    $region37: #{dilated_res_block.4} parent=5 // pred_check
      _
    $region38: #{dilated_res_block.4} parent=5 // pred_check_branch
      %219 = sbr.rel (%p216) target = $region40
    $region39: #{dilated_res_block.4} parent=5 // pred_region
      %s220 = ssub.s32 %s13, 1
      %p221 = scmp.lt.s32.totalorder %s18, 1
      %s222 = scalar_select %p221, %s18, 1
      %s223 = smul.addr %s222, 2
      %s224 = smul.addr %s223, 8
      %s225 = scalar_lea.vmem %s0, %s224
      %p226 = pneg %p39
      %p227 = pneg %p36
      %p228 = pneg %p60
      %p229 = pneg %p57
      %p230 = pneg %p81
      %p231 = pneg %p78
      %p232 = pneg %p102
      %p233 = pneg %p99
      %p234 = pneg %p123
      %p235 = pneg %p120
      %p236 = pneg %p149
      %p237 = pneg %p146
      %p238 = scmp.lt.s32.totalorder %s18, 1
      %s239 = scalar_select %p238, %s18, 1
      %s240 = smul.addr %s239, 2
      %s241 = smul.addr %s240, 8
      %s242 = scalar_lea.vmem %s5, %s241
      %p243 = pneg %p175
      %p244 = pneg %p172
      %p245 = scmp.lt.s32.totalorder %s18, 1
      %s246 = scalar_select %p245, %s18, 1
      %s247 = smul.addr %s246, 2
      %s248 = scalar_lea.vmem %s6, %s247
      %p249 = scmp.lt.s32.totalorder %s18, 1
      %s250 = scalar_select %p249, %s18, 1
      %s251 = smul.addr %s250, 2
      %s252 = smul.addr %s251, 8
      %s253 = scalar_lea.vmem %s0, %s252
      %p254 = scmp.lt.s32.totalorder %s18, 1
      %s255 = scalar_select %p254, %s18, 1
      %s256 = smul.addr %s255, 2
      %s257 = smul.addr %s256, 8
      %s258 = scalar_lea.vmem %s5, %s257
      %p259 = scmp.lt.s32.totalorder %s18, 1
      %s260 = scalar_select %p259, %s18, 1
      %s261 = smul.addr %s260, 2
      %s262 = scalar_lea.vmem %s6, %s261
      %263 = vst [vmem:[#allocation2] sm:$0x3] 0.0
      %264 = vst [vmem:[#allocation2 + $0x12] sm:$0x3] 0.0
      %v265 = vld [vmem:[%s253] sm:$0xff]
      %v266 = vld [vmem:[%s253 + $0x8] sm:$0xff]
      %v267 = vld [vmem:[%s2] sm:$0x1]
      %v269 = vlaneseq
      %v270 = vshrl.u32 %v269, 7
      %v271 = vsub.s32 0, %v270
      %v272 = vrot.slane %v267, %v271
      %v274 = vmul.f32 %v265, %v272
      %v275 = vmul.f32 %v266, %v272
      %v276 = vld [vmem:[%s3] sm:$0x1]
      %v278 = vlaneseq
      %v279 = vshrl.u32 %v278, 7
      %v280 = vsub.s32 0, %v279
      %v281 = vrot.slane %v276, %v280
      %v283 = vadd.f32 %v274, %v281
      %v284 = vadd.f32 %v275, %v281
      %v285 = vmax.f32 %v283, 0.0
      %v286 = vmax.f32 %v284, 0.0
      %287 = vst [vmem:[#allocation2 + $0x2] sm:$0xff] %v285
      %288 = vst [vmem:[#allocation2 + $0xa] sm:$0xff] %v286
      %v289 = vld [vmem:[#allocation2] sm:$0xff]
      %v290 = vld [vmem:[#allocation2 + $0x8] sm:$0xff]
      %v291 = vld [vmem:[%s1] sm:$0xff]
      %v292 = vld [vmem:[%s1 + $0x8] sm:$0xff]
      %v293 = vld [vmem:[%s1 + $0x10] sm:$0xff]
      %v294 = vld [vmem:[%s1 + $0x18] sm:$0xff]
      %v295 = vld [vmem:[%s1 + $0x20] sm:$0xff]
      %v296 = vld [vmem:[%s1 + $0x28] sm:$0xff]
      %v297 = vld [vmem:[%s1 + $0x30] sm:$0xff]
      %v298 = vld [vmem:[%s1 + $0x38] sm:$0xff]
      %v299 = vld [vmem:[%s1 + $0x40] sm:$0xff]
      %v300 = vld [vmem:[%s1 + $0x48] sm:$0xff]
      %v301 = vld [vmem:[%s1 + $0x50] sm:$0xff]
      %v302 = vld [vmem:[%s1 + $0x58] sm:$0xff]
      %v303 = vld [vmem:[%s1 + $0x60] sm:$0xff]
      %v304 = vld [vmem:[%s1 + $0x68] sm:$0xff]
      %v305 = vld [vmem:[%s1 + $0x70] sm:$0xff]
      %v306 = vld [vmem:[%s1 + $0x78] sm:$0xff]
      %s307 = scalar_lea.vmem %s1, 128
      %v308 = vld [vmem:[%s307] sm:$0xff]
      %v309 = vld [vmem:[%s307 + $0x8] sm:$0xff]
      %v310 = vld [vmem:[%s307 + $0x10] sm:$0xff]
      %v311 = vld [vmem:[%s307 + $0x18] sm:$0xff]
      %v312 = vld [vmem:[%s307 + $0x20] sm:$0xff]
      %v313 = vld [vmem:[%s307 + $0x28] sm:$0xff]
      %v314 = vld [vmem:[%s307 + $0x30] sm:$0xff]
      %v315 = vld [vmem:[%s307 + $0x38] sm:$0xff]
      %v316 = vld [vmem:[%s307 + $0x40] sm:$0xff]
      %v317 = vld [vmem:[%s307 + $0x48] sm:$0xff]
      %v318 = vld [vmem:[%s307 + $0x50] sm:$0xff]
      %v319 = vld [vmem:[%s307 + $0x58] sm:$0xff]
      %v320 = vld [vmem:[%s307 + $0x60] sm:$0xff]
      %v321 = vld [vmem:[%s307 + $0x68] sm:$0xff]
      %v322 = vld [vmem:[%s307 + $0x70] sm:$0xff]
      %v323 = vld [vmem:[%s307 + $0x78] sm:$0xff]
      %324 = vmatprep.subr.mxu0 0.0
      %325 = vmatpush1.msra.mxu0 %v323
      %326 = vmatprep.subr.mxu0 0.0
      %327 = vmatpush1.msra.mxu0 %v322
      %328 = vmatprep.subr.mxu0 0.0
      %329 = vmatpush1.msra.mxu0 %v321
      %330 = vmatprep.subr.mxu0 0.0
      %331 = vmatpush1.msra.mxu0 %v320
      %332 = vmatprep.subr.mxu0 0.0
      %333 = vmatpush1.msra.mxu0 %v319
      %334 = vmatprep.subr.mxu0 0.0
      %335 = vmatpush1.msra.mxu0 %v318
      %336 = vmatprep.subr.mxu0 0.0
      %337 = vmatpush1.msra.mxu0 %v317
      %338 = vmatprep.subr.mxu0 0.0
      %339 = vmatpush1.msra.mxu0 %v316
      %340 = vmatprep.subr.mxu0 0.0
      %341 = vmatpush1.msra.mxu0 %v315
      %342 = vmatprep.subr.mxu0 0.0
      %343 = vmatpush1.msra.mxu0 %v314
      %344 = vmatprep.subr.mxu0 0.0
      %345 = vmatpush1.msra.mxu0 %v313
      %346 = vmatprep.subr.mxu0 0.0
      %347 = vmatpush1.msra.mxu0 %v312
      %348 = vmatprep.subr.mxu0 0.0
      %349 = vmatpush1.msra.mxu0 %v311
      %350 = vmatprep.subr.mxu0 0.0
      %351 = vmatpush1.msra.mxu0 %v310
      %352 = vmatprep.subr.mxu0 0.0
      %353 = vmatpush1.msra.mxu0 %v309
      %354 = vmatprep.subr.mxu0 0.0
      %355 = vmatpush1.msra.mxu0 %v308
      %356 = vmatprep.subr.mxu0 0.0
      %357 = vmatpush2.msra.mxu0 0.0
      %358 = vmatprep.subr.mxu0 0.0
      %359 = vmatpush2.msra.mxu0 0.0
      %360 = vmatprep.subr.mxu0 0.0
      %361 = vmatpush2.msra.mxu0 0.0
      %362 = vmatprep.subr.mxu0 0.0
      %363 = vmatpush2.msra.mxu0 0.0
      %364 = vmatprep.subr.mxu0 0.0
      %365 = vmatpush2.msra.mxu0 0.0
      %366 = vmatprep.subr.mxu0 0.0
      %367 = vmatpush2.msra.mxu0 0.0
      %368 = vmatprep.subr.mxu0 0.0
      %369 = vmatpush2.msra.mxu0 0.0
      %370 = vmatprep.subr.mxu0 0.0
      %371 = vmatpush2.msra.mxu0 0.0
      %372 = vmatprep.subr.mxu0 0.0
      %373 = vmatpush2.msra.mxu0 0.0
      %374 = vmatprep.subr.mxu0 0.0
      %375 = vmatpush2.msra.mxu0 0.0
      %376 = vmatprep.subr.mxu0 0.0
      %377 = vmatpush2.msra.mxu0 0.0
      %378 = vmatprep.subr.mxu0 0.0
      %379 = vmatpush2.msra.mxu0 0.0
      %380 = vmatprep.subr.mxu0 0.0
      %381 = vmatpush2.msra.mxu0 0.0
      %382 = vmatprep.subr.mxu0 0.0
      %383 = vmatpush2.msra.mxu0 0.0
      %384 = vmatprep.subr.mxu0 0.0
      %385 = vmatpush2.msra.mxu0 0.0
      %386 = vmatprep.subr.mxu0 0.0
      %387 = vmatpush2.msra.mxu0 0.0
      %388 = vmatprep.mubr.f32.mxu0 0.0
      %389 = vmatmul.mubr.f32.gmra.mxu0 %v285
      %v390 = vpop.f32.mrf.mxu0
      %v391 = vadd.f32 0.0, %v390
      %v392 = vpop.f32.mrf.mxu0
      %393 = vmatprep.mubr.f32.mxu0 0.0
      %394 = vmatmul.mubr.f32.gmra.mxu0 %v286
      %v395 = vpop.f32.mrf.mxu0
      %v396 = vadd.f32 0.0, %v395
      %v397 = vpop.f32.mrf.mxu0
      %398 = vdwg.mxu0
      %399 = vmatprep.subr.mxu0 0.0
      %400 = vmatpush1.msra.mxu0 %v306
      %401 = vmatprep.subr.mxu0 0.0
      %402 = vmatpush1.msra.mxu0 %v305
      %403 = vmatprep.subr.mxu0 0.0
      %404 = vmatpush1.msra.mxu0 %v304
      %405 = vmatprep.subr.mxu0 0.0
      %406 = vmatpush1.msra.mxu0 %v303
      %407 = vmatprep.subr.mxu0 0.0
      %408 = vmatpush1.msra.mxu0 %v302
      %409 = vmatprep.subr.mxu0 0.0
      %410 = vmatpush1.msra.mxu0 %v301
      %411 = vmatprep.subr.mxu0 0.0
      %412 = vmatpush1.msra.mxu0 %v300
      %413 = vmatprep.subr.mxu0 0.0
      %414 = vmatpush1.msra.mxu0 %v299
      %415 = vmatprep.subr.mxu0 0.0
      %416 = vmatpush1.msra.mxu0 %v298
      %417 = vmatprep.subr.mxu0 0.0
      %418 = vmatpush1.msra.mxu0 %v297
      %419 = vmatprep.subr.mxu0 0.0
      %420 = vmatpush1.msra.mxu0 %v296
      %421 = vmatprep.subr.mxu0 0.0
      %422 = vmatpush1.msra.mxu0 %v295
      %423 = vmatprep.subr.mxu0 0.0
      %424 = vmatpush1.msra.mxu0 %v294
      %425 = vmatprep.subr.mxu0 0.0
      %426 = vmatpush1.msra.mxu0 %v293
      %427 = vmatprep.subr.mxu0 0.0
      %428 = vmatpush1.msra.mxu0 %v292
      %429 = vmatprep.subr.mxu0 0.0
      %430 = vmatpush1.msra.mxu0 %v291
      %431 = vmatprep.subr.mxu0 0.0
      %432 = vmatpush2.msra.mxu0 0.0
      %433 = vmatprep.subr.mxu0 0.0
      %434 = vmatpush2.msra.mxu0 0.0
      %435 = vmatprep.subr.mxu0 0.0
      %436 = vmatpush2.msra.mxu0 0.0
      %437 = vmatprep.subr.mxu0 0.0
      %438 = vmatpush2.msra.mxu0 0.0
      %439 = vmatprep.subr.mxu0 0.0
      %440 = vmatpush2.msra.mxu0 0.0
      %441 = vmatprep.subr.mxu0 0.0
      %442 = vmatpush2.msra.mxu0 0.0
      %443 = vmatprep.subr.mxu0 0.0
      %444 = vmatpush2.msra.mxu0 0.0
      %445 = vmatprep.subr.mxu0 0.0
      %446 = vmatpush2.msra.mxu0 0.0
      %447 = vmatprep.subr.mxu0 0.0
      %448 = vmatpush2.msra.mxu0 0.0
      %449 = vmatprep.subr.mxu0 0.0
      %450 = vmatpush2.msra.mxu0 0.0
      %451 = vmatprep.subr.mxu0 0.0
      %452 = vmatpush2.msra.mxu0 0.0
      %453 = vmatprep.subr.mxu0 0.0
      %454 = vmatpush2.msra.mxu0 0.0
      %455 = vmatprep.subr.mxu0 0.0
      %456 = vmatpush2.msra.mxu0 0.0
      %457 = vmatprep.subr.mxu0 0.0
      %458 = vmatpush2.msra.mxu0 0.0
      %459 = vmatprep.subr.mxu0 0.0
      %460 = vmatpush2.msra.mxu0 0.0
      %461 = vmatprep.subr.mxu0 0.0
      %462 = vmatpush2.msra.mxu0 0.0
      %463 = vmatprep.mubr.f32.mxu0 0.0
      %464 = vmatmul.mubr.f32.gmra.mxu0 %v289
      %v465 = vpop.f32.mrf.mxu0
      %v466 = vadd.f32 %v391, %v465
      %v467 = vpop.f32.mrf.mxu0
      %468 = vmatprep.mubr.f32.mxu0 0.0
      %469 = vmatmul.mubr.f32.gmra.mxu0 %v290
      %v470 = vpop.f32.mrf.mxu0
      %v471 = vadd.f32 %v396, %v470
      %v472 = vpop.f32.mrf.mxu0
      %473 = vdwg.mxu0
      %v474 = vld [vmem:[#allocation2 + $0x4] sm:$0xff]
      %v475 = vld [vmem:[#allocation2 + $0xc] sm:$0xff]
      %s476 = scalar_lea.vmem %s1, 256
      %v477 = vld [vmem:[%s476] sm:$0xff]
      %v478 = vld [vmem:[%s476 + $0x8] sm:$0xff]
      %v479 = vld [vmem:[%s476 + $0x10] sm:$0xff]
      %v480 = vld [vmem:[%s476 + $0x18] sm:$0xff]
      %v481 = vld [vmem:[%s476 + $0x20] sm:$0xff]
      %v482 = vld [vmem:[%s476 + $0x28] sm:$0xff]
      %v483 = vld [vmem:[%s476 + $0x30] sm:$0xff]
      %v484 = vld [vmem:[%s476 + $0x38] sm:$0xff]
      %v485 = vld [vmem:[%s476 + $0x40] sm:$0xff]
      %v486 = vld [vmem:[%s476 + $0x48] sm:$0xff]
      %v487 = vld [vmem:[%s476 + $0x50] sm:$0xff]
      %v488 = vld [vmem:[%s476 + $0x58] sm:$0xff]
      %v489 = vld [vmem:[%s476 + $0x60] sm:$0xff]
      %v490 = vld [vmem:[%s476 + $0x68] sm:$0xff]
      %v491 = vld [vmem:[%s476 + $0x70] sm:$0xff]
      %v492 = vld [vmem:[%s476 + $0x78] sm:$0xff]
      %493 = vmatprep.subr.mxu0 0.0
      %494 = vmatpush1.msra.mxu0 %v492
      %495 = vmatprep.subr.mxu0 0.0
      %496 = vmatpush1.msra.mxu0 %v491
      %497 = vmatprep.subr.mxu0 0.0
      %498 = vmatpush1.msra.mxu0 %v490
      %499 = vmatprep.subr.mxu0 0.0
      %500 = vmatpush1.msra.mxu0 %v489
      %501 = vmatprep.subr.mxu0 0.0
      %502 = vmatpush1.msra.mxu0 %v488
      %503 = vmatprep.subr.mxu0 0.0
      %504 = vmatpush1.msra.mxu0 %v487
      %505 = vmatprep.subr.mxu0 0.0
      %506 = vmatpush1.msra.mxu0 %v486
      %507 = vmatprep.subr.mxu0 0.0
      %508 = vmatpush1.msra.mxu0 %v485
      %509 = vmatprep.subr.mxu0 0.0
      %510 = vmatpush1.msra.mxu0 %v484
      %511 = vmatprep.subr.mxu0 0.0
      %512 = vmatpush1.msra.mxu0 %v483
      %513 = vmatprep.subr.mxu0 0.0
      %514 = vmatpush1.msra.mxu0 %v482
      %515 = vmatprep.subr.mxu0 0.0
      %516 = vmatpush1.msra.mxu0 %v481
      %517 = vmatprep.subr.mxu0 0.0
      %518 = vmatpush1.msra.mxu0 %v480
      %519 = vmatprep.subr.mxu0 0.0
      %520 = vmatpush1.msra.mxu0 %v479
      %521 = vmatprep.subr.mxu0 0.0
      %522 = vmatpush1.msra.mxu0 %v478
      %523 = vmatprep.subr.mxu0 0.0
      %524 = vmatpush1.msra.mxu0 %v477
      %525 = vmatprep.subr.mxu0 0.0
      %526 = vmatpush2.msra.mxu0 0.0
      %527 = vmatprep.subr.mxu0 0.0
      %528 = vmatpush2.msra.mxu0 0.0
      %529 = vmatprep.subr.mxu0 0.0
      %530 = vmatpush2.msra.mxu0 0.0
      %531 = vmatprep.subr.mxu0 0.0
      %532 = vmatpush2.msra.mxu0 0.0
      %533 = vmatprep.subr.mxu0 0.0
      %534 = vmatpush2.msra.mxu0 0.0
      %535 = vmatprep.subr.mxu0 0.0
      %536 = vmatpush2.msra.mxu0 0.0
      %537 = vmatprep.subr.mxu0 0.0
      %538 = vmatpush2.msra.mxu0 0.0
      %539 = vmatprep.subr.mxu0 0.0
      %540 = vmatpush2.msra.mxu0 0.0
      %541 = vmatprep.subr.mxu0 0.0
      %542 = vmatpush2.msra.mxu0 0.0
      %543 = vmatprep.subr.mxu0 0.0
      %544 = vmatpush2.msra.mxu0 0.0
      %545 = vmatprep.subr.mxu0 0.0
      %546 = vmatpush2.msra.mxu0 0.0
      %547 = vmatprep.subr.mxu0 0.0
      %548 = vmatpush2.msra.mxu0 0.0
      %549 = vmatprep.subr.mxu0 0.0
      %550 = vmatpush2.msra.mxu0 0.0
      %551 = vmatprep.subr.mxu0 0.0
      %552 = vmatpush2.msra.mxu0 0.0
      %553 = vmatprep.subr.mxu0 0.0
      %554 = vmatpush2.msra.mxu0 0.0
      %555 = vmatprep.subr.mxu0 0.0
      %556 = vmatpush2.msra.mxu0 0.0
      %557 = vmatprep.mubr.f32.mxu0 0.0
      %558 = vmatmul.mubr.f32.gmra.mxu0 %v474
      %v559 = vpop.f32.mrf.mxu0
      %v560 = vadd.f32 0.0, %v559
      %v561 = vpop.f32.mrf.mxu0
      %562 = vmatprep.mubr.f32.mxu0 0.0
      %563 = vmatmul.mubr.f32.gmra.mxu0 %v475
      %v564 = vpop.f32.mrf.mxu0
      %v565 = vadd.f32 0.0, %v564
      %v566 = vpop.f32.mrf.mxu0
      %567 = vdwg.mxu0
      %v568 = vadd.f32 %v466, %v560
      %v569 = vadd.f32 %v471, %v565
      %570 = vst [vmem:[%s258] sm:$0xff] %v568
      %571 = vst [vmem:[%s258 + $0x8] sm:$0xff] %v569
      %v572 = vadd.f32 %v568, %v569
      %v573 = vrot.slane %v572, 4
      %v574 = vadd.f32 %v572, %v573
      %v575 = vrot.slane %v574, 2
      %v576 = vadd.f32 %v574, %v575
      %v577 = vrot.slane %v576, 1
      %v578 = vadd.f32 %v576, %v577
      %v579 = vmul.f32 %v568, %v568
      %v580 = vmul.f32 %v569, %v569
      %v581 = vadd.f32 %v579, %v580
      %v582 = vrot.slane %v581, 4
      %v583 = vadd.f32 %v581, %v582
      %v584 = vrot.slane %v583, 2
      %v585 = vadd.f32 %v583, %v584
      %v586 = vrot.slane %v585, 1
      %v587 = vadd.f32 %v585, %v586
      %vm588 = vcmask 1040384
      %v589 = vsel %vm588, %v578, %v587
      %v590 = vld [vmem:[%s4] sm:$0xff]
      %v591 = vld [vmem:[%s4 + $0x8] sm:$0xff]
      %v592 = vld [vmem:[%s4 + $0x10] sm:$0xff]
      %v593 = vld [vmem:[%s4 + $0x18] sm:$0xff]
      %v594 = vld [vmem:[%s4 + $0x20] sm:$0xff]
      %v595 = vld [vmem:[%s4 + $0x28] sm:$0xff]
      %v596 = vld [vmem:[%s4 + $0x30] sm:$0xff]
      %v597 = vld [vmem:[%s4 + $0x38] sm:$0xff]
      %v598 = vld [vmem:[%s4 + $0x40] sm:$0xff]
      %v599 = vld [vmem:[%s4 + $0x48] sm:$0xff]
      %v600 = vld [vmem:[%s4 + $0x50] sm:$0xff]
      %v601 = vld [vmem:[%s4 + $0x58] sm:$0xff]
      %v602 = vld [vmem:[%s4 + $0x60] sm:$0xff]
      %v603 = vld [vmem:[%s4 + $0x68] sm:$0xff]
      %v604 = vld [vmem:[%s4 + $0x70] sm:$0xff]
      %v605 = vld [vmem:[%s4 + $0x78] sm:$0xff]
      %606 = vmatprep.subr.mxu0 0.0
      %607 = vmatpush1.msra.mxu0 %v605
      %608 = vmatprep.subr.mxu0 0.0
      %609 = vmatpush1.msra.mxu0 %v604
      %610 = vmatprep.subr.mxu0 0.0
      %611 = vmatpush1.msra.mxu0 %v603
      %612 = vmatprep.subr.mxu0 0.0
      %613 = vmatpush1.msra.mxu0 %v602
      %614 = vmatprep.subr.mxu0 0.0
      %615 = vmatpush1.msra.mxu0 %v601
      %616 = vmatprep.subr.mxu0 0.0
      %617 = vmatpush1.msra.mxu0 %v600
      %618 = vmatprep.subr.mxu0 0.0
      %619 = vmatpush1.msra.mxu0 %v599
      %620 = vmatprep.subr.mxu0 0.0
      %621 = vmatpush1.msra.mxu0 %v598
      %622 = vmatprep.subr.mxu0 0.0
      %623 = vmatpush1.msra.mxu0 %v597
      %624 = vmatprep.subr.mxu0 0.0
      %625 = vmatpush1.msra.mxu0 %v596
      %626 = vmatprep.subr.mxu0 0.0
      %627 = vmatpush1.msra.mxu0 %v595
      %628 = vmatprep.subr.mxu0 0.0
      %629 = vmatpush1.msra.mxu0 %v594
      %630 = vmatprep.subr.mxu0 0.0
      %631 = vmatpush1.msra.mxu0 %v593
      %632 = vmatprep.subr.mxu0 0.0
      %633 = vmatpush1.msra.mxu0 %v592
      %634 = vmatprep.subr.mxu0 0.0
      %635 = vmatpush1.msra.mxu0 %v591
      %636 = vmatprep.subr.mxu0 0.0
      %637 = vmatpush1.msra.mxu0 %v590
      %638 = vmatprep.subr.mxu0 0.0
      %639 = vmatpush2.msra.mxu0 0.0
      %640 = vmatprep.subr.mxu0 0.0
      %641 = vmatpush2.msra.mxu0 0.0
      %642 = vmatprep.subr.mxu0 0.0
      %643 = vmatpush2.msra.mxu0 0.0
      %644 = vmatprep.subr.mxu0 0.0
      %645 = vmatpush2.msra.mxu0 0.0
      %646 = vmatprep.subr.mxu0 0.0
      %647 = vmatpush2.msra.mxu0 0.0
      %648 = vmatprep.subr.mxu0 0.0
      %649 = vmatpush2.msra.mxu0 0.0
      %650 = vmatprep.subr.mxu0 0.0
      %651 = vmatpush2.msra.mxu0 0.0
      %652 = vmatprep.subr.mxu0 0.0
      %653 = vmatpush2.msra.mxu0 0.0
      %654 = vmatprep.subr.mxu0 0.0
      %655 = vmatpush2.msra.mxu0 0.0
      %656 = vmatprep.subr.mxu0 0.0
      %657 = vmatpush2.msra.mxu0 0.0
      %658 = vmatprep.subr.mxu0 0.0
      %659 = vmatpush2.msra.mxu0 0.0
      %660 = vmatprep.subr.mxu0 0.0
      %661 = vmatpush2.msra.mxu0 0.0
      %662 = vmatprep.subr.mxu0 0.0
      %663 = vmatpush2.msra.mxu0 0.0
      %664 = vmatprep.subr.mxu0 0.0
      %665 = vmatpush2.msra.mxu0 0.0
      %666 = vmatprep.subr.mxu0 0.0
      %667 = vmatpush2.msra.mxu0 0.0
      %668 = vmatprep.subr.mxu0 0.0
      %669 = vmatpush2.msra.mxu0 0.0
      %670 = vmatprep.mubr.f32.mxu0 0.0
      %671 = vmatmul.mubr.f32.gmra.mxu0 %v589
      %v672 = vpop.f32.mrf.mxu0
      %v673 = vadd.f32 0.0, %v672
      %v674 = vpop.f32.mrf.mxu0
      %675 = vdwg.mxu0
      %vm676 = vcmask 58368
      %677 = vst.msk [vmem:[%s262] sm:$0x3] %vm676, %v673
      %p678 = scmp.lt.s32.totalorder %s18, 1
      %s679 = scalar_select %p678, %s18, 1
      %s680 = smul.addr %s679, 2
      %s681 = smul.addr %s680, 8
      %s682 = scalar_lea.vmem %s5, %s681
      %p683 = scmp.lt.s32.totalorder %s18, 1
      %s684 = scalar_select %p683, %s18, 1
      %s685 = smul.addr %s684, 2
      %s686 = scalar_lea.vmem %s6, %s685
      // Predicated region
      $region41: #{dilated_res_block.4} parent=39 // pred_check
        %p687 = pneg %p146
      $region42: #{dilated_res_block.4} parent=39 // pred_check_branch
        %689 = sbr.rel (%p687) target = $region44
      $region43: #{dilated_res_block.4} parent=39 // pred_region
        _
      $region44: #{dilated_res_block.4} parent=39 // pred_fallthru
        _
      // Predicated region
      $region45: #{dilated_res_block.4} parent=39 // pred_check
        %p690 = pneg %p172
      $region46: #{dilated_res_block.4} parent=39 // pred_check_branch
        %692 = sbr.rel (%p690) target = $region48
      $region47: #{dilated_res_block.4} parent=39 // pred_region
        _
      $region48: #{dilated_res_block.4} parent=39 // pred_fallthru
        _
    $region40: #{dilated_res_block.4} parent=5 // pred_fallthru
      _
    %p693 = scmp.le.s32.totalorder 2, %s13
    // Predicated region
    $region49: #{dilated_res_block.4} parent=5 // pred_check
      %p694 = pneg %p693
    $region50: #{dilated_res_block.4} parent=5 // pred_check_branch
      %696 = sbr.rel (%p694) target = $region52
    $region51: #{dilated_res_block.4} parent=5 // pred_region
      %s697 = ssub.s32 %s13, 2
      // Predicated region
      $region53: #{dilated_res_block.4} parent=51 // pred_check
        %p698 = pneg %p152
      $region54: #{dilated_res_block.4} parent=51 // pred_check_branch
        %700 = sbr.rel (%p698) target = $region56
      $region55: #{dilated_res_block.4} parent=51 // pred_region
        %p701 = scmp.lt.s32.totalorder %s19, 1
        %s702 = scalar_select %p701, %s19, 1
        %s703 = smul.addr %s702, 2
        %s704 = smul.addr %s703, 8
        %s705 = scalar_lea.vmem %s5, %s704
      $region56: #{dilated_res_block.4} parent=51 // pred_fallthru
        _
      // Predicated region
      $region57: #{dilated_res_block.4} parent=51 // pred_check
        %p706 = pneg %p178
      $region58: #{dilated_res_block.4} parent=51 // pred_check_branch
        %708 = sbr.rel (%p706) target = $region60
      $region59: #{dilated_res_block.4} parent=51 // pred_region
        %p709 = scmp.lt.s32.totalorder %s19, 1
        %s710 = scalar_select %p709, %s19, 1
        %s711 = smul.addr %s710, 2
        %s712 = scalar_lea.vmem %s6, %s711
      $region60: #{dilated_res_block.4} parent=51 // pred_fallthru
        _
    $region52: #{dilated_res_block.4} parent=5 // pred_fallthru
      _
  $region6: #{dilated_res_block.4} parent=0 // loop_footer
    %s17 = sadd.s32 1, %s13
  $region7: #{dilated_res_block.4} parent=0 // loop_footer_branch
    %12 = sbr.rel target = $region3
  $region8: #{dilated_res_block.4} parent=0 // loop_exit
    _

// kernel: dilated_res_block.3
$region0: #{dilated_res_block.3}
  #allocation0 [shape = 'u32[]', space=smem, size = 0x4, offset = 0x4, fixed_abs, tag = 'smem constant byte address 0x4 - core index']
  #allocation1 [shape = 'u32[144,128]{1,0:T(1,128)}', space=vmem, size = 0x12000, scoped, tag = 'internal scratch']
  #allocation2 [shape = 'f32[20,64]{1,0:T(8,128)}', space=vmem, size = 0x3000, scoped, tag = 'scratch operand']
  %s0 = inlined_call_operand.vmem [shape: f32[2,16,64], index: 0, kind: input, shape index: {}]
  %s1 = inlined_call_operand.vmem [shape: f32[3,64,128], index: 1, kind: input, shape index: {}]
  %s2 = inlined_call_operand.vmem [shape: f32[64,128], index: 2, kind: input, shape index: {}]
  %s3 = inlined_call_operand.vmem [shape: f32[128,8], index: 3, kind: input, shape index: {}]
  %s4 = inlined_call_operand.vmem [shape: f32[2,16,128], index: 4, kind: output, shape index: {0}]
  %s5 = inlined_call_operand.vmem [shape: f32[2,4,8], index: 5, kind: output, shape index: {1}]
  %6 = xla_tuple %s4, %s5
  %s7 = sld [smem:[#allocation0]]
  $region57: #{dilated_res_block.3} parent=0
    _
  %s9 = ssub.s32 1, %s7
  %s10 = scalar_select 0, %s9, %s7
  loop: start=0, step=1, limit=4
  $region2: #{dilated_res_block.3} parent=0 // loop_pre_header
    _
  $region3: #{dilated_res_block.3} parent=0 // loop_header
    %s12 = sphi 0, %s16
    %p13 = scmp.ge.s32.totalorder %s12, 4
    %s22 = sphi 0, %s24
    %s25 = sphi 0, %s22
    %s26 = sphi 0, %s25
    %s42 = sphi 0, %s26
    %s46 = sphi 0, %s46
    %s48 = sphi 0, %s46
    %s49 = sphi 0, %s48
    %s63 = sphi 0, %s49
    %s67 = sphi 0, %s67
    %s69 = sphi 0, %s67
    %s70 = sphi 0, %s69
    %s84 = sphi 0, %s70
    %s88 = sphi 0, %s88
    %s90 = sphi 0, %s88
    %s91 = sphi 0, %s90
    %s105 = sphi 0, %s91
    %s111 = sphi 0, %s113
    %s114 = sphi 0, %s111
    %s115 = sphi 0, %s114
    %s131 = sphi 0, %s115
    %s137 = sphi 0, %s139
    %s140 = sphi 0, %s137
    %s141 = sphi 0, %s140
    %s157 = sphi 0, %s141
  $region4: #{dilated_res_block.3} parent=0 // loop_header_branch
    %15 = sbr.rel (%p13) target = $region8
  $region5: #{dilated_res_block.3} parent=0 // loop_body
    %s17 = ssub.s32 %s12, 1
    %s18 = ssub.s32 %s12, 2
    %s19 = sadd.s32 %s12, 1
    %s20 = ssub.s32 %s12, %s19
    %p21 = scmp.eq.s32.totalorder %s20, 0
    %s23 = sadd.s32 %s22, 1
    %s24 = scalar_select %p21, %s22, %s23
    %p27 = pneg %p21
    %p28 = scmp.eq.s32.totalorder %s12, 1
    %p29 = por %p27, %p28
    %p30 = scmp.ne.s32.totalorder %s22, %s25
    %p31 = scmp.eq.s32.totalorder %s12, 0
    %p32 = por %p30, %p31
    %p33 = scmp.ne.s32.totalorder %s22, %s25
    %p34 = scmp.eq.s32.totalorder %s17, 1
    %p35 = por %p33, %p34
    %p36 = scmp.ne.s32.totalorder %s25, %s26
    %p37 = scmp.eq.s32.totalorder %s17, 0
    %p38 = por %p36, %p37
    %p39 = scmp.ne.s32.totalorder %s25, %s26
    %p40 = scmp.eq.s32.totalorder %s18, 1
    %p41 = por %p39, %p40
    %p43 = scmp.ne.s32.totalorder %s26, %s42
    %p44 = scmp.eq.s32.totalorder %s18, 0
    %p45 = por %p43, %p44
    %s47 = sadd.s32 %s46, 1
    %p50 = scmp.eq.s32.totalorder %s12, 1
    %p51 = scmp.ne.s32.totalorder %s46, %s48
    %p52 = scmp.eq.s32.totalorder %s12, 0
    %p53 = por %p51, %p52
    %p54 = scmp.ne.s32.totalorder %s46, %s48
    %p55 = scmp.eq.s32.totalorder %s17, 1
    %p56 = por %p54, %p55
    %p57 = scmp.ne.s32.totalorder %s48, %s49
    %p58 = scmp.eq.s32.totalorder %s17, 0
    %p59 = por %p57, %p58
    %p60 = scmp.ne.s32.totalorder %s48, %s49
    %p61 = scmp.eq.s32.totalorder %s18, 1
    %p62 = por %p60, %p61
    %p64 = scmp.ne.s32.totalorder %s49, %s63
    %p65 = scmp.eq.s32.totalorder %s18, 0
    %p66 = por %p64, %p65
    %s68 = sadd.s32 %s67, 1
    %p71 = scmp.eq.s32.totalorder %s12, 1
    %p72 = scmp.ne.s32.totalorder %s67, %s69
    %p73 = scmp.eq.s32.totalorder %s12, 0
    %p74 = por %p72, %p73
    %p75 = scmp.ne.s32.totalorder %s67, %s69
    %p76 = scmp.eq.s32.totalorder %s17, 1
    %p77 = por %p75, %p76
    %p78 = scmp.ne.s32.totalorder %s69, %s70
    %p79 = scmp.eq.s32.totalorder %s17, 0
    %p80 = por %p78, %p79
    %p81 = scmp.ne.s32.totalorder %s69, %s70
    %p82 = scmp.eq.s32.totalorder %s18, 1
    %p83 = por %p81, %p82
    %p85 = scmp.ne.s32.totalorder %s70, %s84
    %p86 = scmp.eq.s32.totalorder %s18, 0
    %p87 = por %p85, %p86
    %s89 = sadd.s32 %s88, 1
    %p92 = scmp.eq.s32.totalorder %s12, 1
    %p93 = scmp.ne.s32.totalorder %s88, %s90
    %p94 = scmp.eq.s32.totalorder %s12, 0
    %p95 = por %p93, %p94
    %p96 = scmp.ne.s32.totalorder %s88, %s90
    %p97 = scmp.eq.s32.totalorder %s17, 1
    %p98 = por %p96, %p97
    %p99 = scmp.ne.s32.totalorder %s90, %s91
    %p100 = scmp.eq.s32.totalorder %s17, 0
    %p101 = por %p99, %p100
    %p102 = scmp.ne.s32.totalorder %s90, %s91
    %p103 = scmp.eq.s32.totalorder %s18, 1
    %p104 = por %p102, %p103
    %p106 = scmp.ne.s32.totalorder %s91, %s105
    %p107 = scmp.eq.s32.totalorder %s18, 0
    %p108 = por %p106, %p107
    %s109 = ssub.s32 %s12, %s19
    %p110 = scmp.eq.s32.totalorder %s109, 0
    %s112 = sadd.s32 %s111, 1
    %s113 = scalar_select %p110, %s111, %s112
    %p116 = pneg %p110
    %p117 = scmp.eq.s32.totalorder %s12, 1
    %p118 = por %p116, %p117
    %p119 = scmp.ne.s32.totalorder %s111, %s114
    %p120 = scmp.eq.s32.totalorder %s12, 0
    %p121 = por %p119, %p120
    %p122 = scmp.ne.s32.totalorder %s111, %s114
    %p123 = scmp.eq.s32.totalorder %s17, 1
    %p124 = por %p122, %p123
    %p125 = scmp.ne.s32.totalorder %s114, %s115
    %p126 = scmp.eq.s32.totalorder %s17, 0
    %p127 = por %p125, %p126
    %p128 = scmp.ne.s32.totalorder %s114, %s115
    %p129 = scmp.eq.s32.totalorder %s18, 1
    %p130 = por %p128, %p129
    %p132 = scmp.ne.s32.totalorder %s115, %s131
    %p133 = scmp.eq.s32.totalorder %s18, 0
    %p134 = por %p132, %p133
    %s135 = ssub.s32 %s12, %s19
    %p136 = scmp.eq.s32.totalorder %s135, 0
    %s138 = sadd.s32 %s137, 1
    %s139 = scalar_select %p136, %s137, %s138
    %p142 = pneg %p136
    %p143 = scmp.eq.s32.totalorder %s12, 1
    %p144 = por %p142, %p143
    %p145 = scmp.ne.s32.totalorder %s137, %s140
    %p146 = scmp.eq.s32.totalorder %s12, 0
    %p147 = por %p145, %p146
    %p148 = scmp.ne.s32.totalorder %s137, %s140
    %p149 = scmp.eq.s32.totalorder %s17, 1
    %p150 = por %p148, %p149
    %p151 = scmp.ne.s32.totalorder %s140, %s141
    %p152 = scmp.eq.s32.totalorder %s17, 0
    %p153 = por %p151, %p152
    %p154 = scmp.ne.s32.totalorder %s140, %s141
    %p155 = scmp.eq.s32.totalorder %s18, 1
    %p156 = por %p154, %p155
    %p158 = scmp.ne.s32.totalorder %s141, %s157
    %p159 = scmp.eq.s32.totalorder %s18, 0
    %p160 = por %p158, %p159
    %p161 = scmp.le.s32.totalorder 1, %s12
    %p162 = scmp.lt.s32.totalorder %s12, 3
    %p163 = pnand %p161, %p162
    %p164 = pneg %p163
    // Predicated region
    $region9: #{dilated_res_block.3} parent=5 // pred_check
      _
    $region10: #{dilated_res_block.3} parent=5 // pred_check_branch
      %166 = sbr.rel (%p163) target = $region12
    $region11: #{dilated_res_block.3} parent=5 // pred_region
      %s167 = ssub.s32 %s12, 1
      // Predicated region
      $region13: #{dilated_res_block.3} parent=11 // pred_check
        %p168 = pneg %p59
      $region14: #{dilated_res_block.3} parent=11 // pred_check_branch
        %170 = sbr.rel (%p168) target = $region16
      $region15: #{dilated_res_block.3} parent=11 // pred_region
        _
      $region16: #{dilated_res_block.3} parent=11 // pred_fallthru
        _
      // Predicated region
      $region17: #{dilated_res_block.3} parent=11 // pred_check
        %p171 = pneg %p80
      $region18: #{dilated_res_block.3} parent=11 // pred_check_branch
        %173 = sbr.rel (%p171) target = $region20
      $region19: #{dilated_res_block.3} parent=11 // pred_region
        _
      $region20: #{dilated_res_block.3} parent=11 // pred_fallthru
        _
      // Predicated region
      $region21: #{dilated_res_block.3} parent=11 // pred_check
        %p174 = pneg %p101
      $region22: #{dilated_res_block.3} parent=11 // pred_check_branch
        %176 = sbr.rel (%p174) target = $region24
      $region23: #{dilated_res_block.3} parent=11 // pred_region
        _
      $region24: #{dilated_res_block.3} parent=11 // pred_fallthru
        _
    $region12: #{dilated_res_block.3} parent=5 // pred_fallthru
      _
    %p177 = scmp.lt.s32.totalorder %s12, 2
    // Predicated region
    $region25: #{dilated_res_block.3} parent=5 // pred_check
      %p178 = pneg %p177
    $region26: #{dilated_res_block.3} parent=5 // pred_check_branch
      %180 = sbr.rel (%p178) target = $region28
    $region27: #{dilated_res_block.3} parent=5 // pred_region
      // Predicated region
      $region29: #{dilated_res_block.3} parent=27 // pred_check
        %p181 = pneg %p32
      $region30: #{dilated_res_block.3} parent=27 // pred_check_branch
        %183 = sbr.rel (%p181) target = $region32
      $region31: #{dilated_res_block.3} parent=27 // pred_region
        %p184 = scmp.lt.s32.totalorder %s12, 1
        %s185 = scalar_select %p184, %s12, 1
        %s186 = smul.addr %s185, 2
        %s187 = smul.addr %s186, 8
        %s188 = scalar_lea.vmem %s0, %s187
      $region32: #{dilated_res_block.3} parent=27 // pred_fallthru
        _
    $region28: #{dilated_res_block.3} parent=5 // pred_fallthru
      _
    %p189 = scmp.le.s32.totalorder 1, %s12
    %p190 = scmp.lt.s32.totalorder %s12, 3
    %p191 = pnand %p189, %p190
    %p192 = pneg %p191
    // Predicated region
    $region33: #{dilated_res_block.3} parent=5 // pred_check
      _
    $region34: #{dilated_res_block.3} parent=5 // pred_check_branch
      %194 = sbr.rel (%p191) target = $region36
    $region35: #{dilated_res_block.3} parent=5 // pred_region
      %s195 = ssub.s32 %s12, 1
      %p196 = scmp.lt.s32.totalorder %s17, 1
      %s197 = scalar_select %p196, %s17, 1
      %s198 = smul.addr %s197, 2
      %s199 = smul.addr %s198, 8
      %s200 = scalar_lea.vmem %s0, %s199
      %p201 = pneg %p38
      %p202 = pneg %p35
      %p203 = pneg %p59
      %p204 = pneg %p56
      %p205 = pneg %p80
      %p206 = pneg %p77
      %p207 = pneg %p101
      %p208 = pneg %p98
      %p209 = pneg %p127
      %p210 = pneg %p124
      %p211 = scmp.lt.s32.totalorder %s17, 1
      %s212 = scalar_select %p211, %s17, 1
      %s213 = smul.addr %s212, 2
      %s214 = smul.addr %s213, 8
      %s215 = scalar_lea.vmem %s4, %s214
      %p216 = pneg %p153
      %p217 = pneg %p150
      %p218 = scmp.lt.s32.totalorder %s17, 1
      %s219 = scalar_select %p218, %s17, 1
      %s220 = smul.addr %s219, 4
      %s221 = scalar_lea.vmem %s5, %s220
      %p222 = scmp.lt.s32.totalorder %s17, 1
      %s223 = scalar_select %p222, %s17, 1
      %s224 = smul.addr %s223, 2
      %s225 = smul.addr %s224, 8
      %s226 = scalar_lea.vmem %s0, %s225
      %p227 = scmp.lt.s32.totalorder %s17, 1
      %s228 = scalar_select %p227, %s17, 1
      %s229 = smul.addr %s228, 2
      %s230 = smul.addr %s229, 8
      %s231 = scalar_lea.vmem %s4, %s230
      %p232 = scmp.lt.s32.totalorder %s17, 1
      %s233 = scalar_select %p232, %s17, 1
      %s234 = smul.addr %s233, 4
      %s235 = scalar_lea.vmem %s5, %s234
      %vm236 = vcmask 517120
      %237 = vst.msk [vmem:[#allocation2] sm:$0x3] %vm236, 0.0
      %238 = vst.msk [vmem:[#allocation2 + $0x12] sm:$0x3] %vm236, 0.0
      %v239 = vld [vmem:[%s226] sm:$0xff]
      %v240 = vld [vmem:[%s226 + $0x8] sm:$0xff]
      %vm241 = vcmask 523264
      %242 = vst.msk [vmem:[#allocation2 + $0x2] sm:$0xff] %vm241, %v239
      %243 = vst.msk [vmem:[#allocation2 + $0xa] sm:$0xff] %vm241, %v240
      %v244 = vld [vmem:[#allocation2] sm:$0xff]
      %v245 = vld [vmem:[#allocation2 + $0x8] sm:$0xff]
      %v246 = vld [vmem:[%s1] sm:$0xff]
      %v247 = vld [vmem:[%s1 + $0x8] sm:$0xff]
      %v248 = vld [vmem:[%s1 + $0x10] sm:$0xff]
      %v249 = vld [vmem:[%s1 + $0x18] sm:$0xff]
      %v250 = vld [vmem:[%s1 + $0x20] sm:$0xff]
      %v251 = vld [vmem:[%s1 + $0x28] sm:$0xff]
      %v252 = vld [vmem:[%s1 + $0x30] sm:$0xff]
      %v253 = vld [vmem:[%s1 + $0x38] sm:$0xff]
      %s254 = scalar_lea.vmem %s1, 64
      %v255 = vld [vmem:[%s254] sm:$0xff]
      %v256 = vld [vmem:[%s254 + $0x8] sm:$0xff]
      %v257 = vld [vmem:[%s254 + $0x10] sm:$0xff]
      %v258 = vld [vmem:[%s254 + $0x18] sm:$0xff]
      %v259 = vld [vmem:[%s254 + $0x20] sm:$0xff]
      %v260 = vld [vmem:[%s254 + $0x28] sm:$0xff]
      %v261 = vld [vmem:[%s254 + $0x30] sm:$0xff]
      %v262 = vld [vmem:[%s254 + $0x38] sm:$0xff]
      %v264 = vsel %vm241, %v239, 0
      %v267 = vsel %vm241, %v240, 0
      %269 = vmatprep.subr.mxu0 0.0
      %270 = vmatpush1.msra.mxu0 0.0
      %271 = vmatprep.subr.mxu0 0.0
      %272 = vmatpush1.msra.mxu0 0.0
      %273 = vmatprep.subr.mxu0 0.0
      %274 = vmatpush1.msra.mxu0 0.0
      %275 = vmatprep.subr.mxu0 0.0
      %276 = vmatpush1.msra.mxu0 0.0
      %277 = vmatprep.subr.mxu0 0.0
      %278 = vmatpush1.msra.mxu0 0.0
      %279 = vmatprep.subr.mxu0 0.0
      %280 = vmatpush1.msra.mxu0 0.0
      %281 = vmatprep.subr.mxu0 0.0
      %282 = vmatpush1.msra.mxu0 0.0
      %283 = vmatprep.subr.mxu0 0.0
      %284 = vmatpush1.msra.mxu0 0.0
      %285 = vmatprep.subr.mxu0 0.0
      %286 = vmatpush1.msra.mxu0 %v262
      %287 = vmatprep.subr.mxu0 0.0
      %288 = vmatpush1.msra.mxu0 %v261
      %289 = vmatprep.subr.mxu0 0.0
      %290 = vmatpush1.msra.mxu0 %v260
      %291 = vmatprep.subr.mxu0 0.0
      %292 = vmatpush1.msra.mxu0 %v259
      %293 = vmatprep.subr.mxu0 0.0
      %294 = vmatpush1.msra.mxu0 %v258
      %295 = vmatprep.subr.mxu0 0.0
      %296 = vmatpush1.msra.mxu0 %v257
      %297 = vmatprep.subr.mxu0 0.0
      %298 = vmatpush1.msra.mxu0 %v256
      %299 = vmatprep.subr.mxu0 0.0
      %300 = vmatpush1.msra.mxu0 %v255
      %301 = vmatprep.subr.mxu0 0.0
      %302 = vmatpush2.msra.mxu0 0.0
      %303 = vmatprep.subr.mxu0 0.0
      %304 = vmatpush2.msra.mxu0 0.0
      %305 = vmatprep.subr.mxu0 0.0
      %306 = vmatpush2.msra.mxu0 0.0
      %307 = vmatprep.subr.mxu0 0.0
      %308 = vmatpush2.msra.mxu0 0.0
      %309 = vmatprep.subr.mxu0 0.0
      %310 = vmatpush2.msra.mxu0 0.0
      %311 = vmatprep.subr.mxu0 0.0
      %312 = vmatpush2.msra.mxu0 0.0
      %313 = vmatprep.subr.mxu0 0.0
      %314 = vmatpush2.msra.mxu0 0.0
      %315 = vmatprep.subr.mxu0 0.0
      %316 = vmatpush2.msra.mxu0 0.0
      %317 = vmatprep.subr.mxu0 0.0
      %318 = vmatpush2.msra.mxu0 0.0
      %319 = vmatprep.subr.mxu0 0.0
      %320 = vmatpush2.msra.mxu0 0.0
      %321 = vmatprep.subr.mxu0 0.0
      %322 = vmatpush2.msra.mxu0 0.0
      %323 = vmatprep.subr.mxu0 0.0
      %324 = vmatpush2.msra.mxu0 0.0
      %325 = vmatprep.subr.mxu0 0.0
      %326 = vmatpush2.msra.mxu0 0.0
      %327 = vmatprep.subr.mxu0 0.0
      %328 = vmatpush2.msra.mxu0 0.0
      %329 = vmatprep.subr.mxu0 0.0
      %330 = vmatpush2.msra.mxu0 0.0
      %331 = vmatprep.subr.mxu0 0.0
      %332 = vmatpush2.msra.mxu0 0.0
      %333 = vmatprep.mubr.f32.mxu0 0.0
      %334 = vmatmul.mubr.f32.gmra.mxu0 %v264
      %v335 = vpop.f32.mrf.mxu0
      %v336 = vadd.f32 0.0, %v335
      %v337 = vpop.f32.mrf.mxu0
      %338 = vmatprep.mubr.f32.mxu0 0.0
      %339 = vmatmul.mubr.f32.gmra.mxu0 %v267
      %v340 = vpop.f32.mrf.mxu0
      %v341 = vadd.f32 0.0, %v340
      %v342 = vpop.f32.mrf.mxu0
      %343 = vdwg.mxu0
      %v345 = vsel %vm241, %v244, 0
      %v348 = vsel %vm241, %v245, 0
      %350 = vmatprep.subr.mxu0 0.0
      %351 = vmatpush1.msra.mxu0 0.0
      %352 = vmatprep.subr.mxu0 0.0
      %353 = vmatpush1.msra.mxu0 0.0
      %354 = vmatprep.subr.mxu0 0.0
      %355 = vmatpush1.msra.mxu0 0.0
      %356 = vmatprep.subr.mxu0 0.0
      %357 = vmatpush1.msra.mxu0 0.0
      %358 = vmatprep.subr.mxu0 0.0
      %359 = vmatpush1.msra.mxu0 0.0
      %360 = vmatprep.subr.mxu0 0.0
      %361 = vmatpush1.msra.mxu0 0.0
      %362 = vmatprep.subr.mxu0 0.0
      %363 = vmatpush1.msra.mxu0 0.0
      %364 = vmatprep.subr.mxu0 0.0
      %365 = vmatpush1.msra.mxu0 0.0
      %366 = vmatprep.subr.mxu0 0.0
      %367 = vmatpush1.msra.mxu0 %v253
      %368 = vmatprep.subr.mxu0 0.0
      %369 = vmatpush1.msra.mxu0 %v252
      %370 = vmatprep.subr.mxu0 0.0
      %371 = vmatpush1.msra.mxu0 %v251
      %372 = vmatprep.subr.mxu0 0.0
      %373 = vmatpush1.msra.mxu0 %v250
      %374 = vmatprep.subr.mxu0 0.0
      %375 = vmatpush1.msra.mxu0 %v249
      %376 = vmatprep.subr.mxu0 0.0
      %377 = vmatpush1.msra.mxu0 %v248
      %378 = vmatprep.subr.mxu0 0.0
      %379 = vmatpush1.msra.mxu0 %v247
      %380 = vmatprep.subr.mxu0 0.0
      %381 = vmatpush1.msra.mxu0 %v246
      %382 = vmatprep.subr.mxu0 0.0
      %383 = vmatpush2.msra.mxu0 0.0
      %384 = vmatprep.subr.mxu0 0.0
      %385 = vmatpush2.msra.mxu0 0.0
      %386 = vmatprep.subr.mxu0 0.0
      %387 = vmatpush2.msra.mxu0 0.0
      %388 = vmatprep.subr.mxu0 0.0
      %389 = vmatpush2.msra.mxu0 0.0
      %390 = vmatprep.subr.mxu0 0.0
      %391 = vmatpush2.msra.mxu0 0.0
      %392 = vmatprep.subr.mxu0 0.0
      %393 = vmatpush2.msra.mxu0 0.0
      %394 = vmatprep.subr.mxu0 0.0
      %395 = vmatpush2.msra.mxu0 0.0
      %396 = vmatprep.subr.mxu0 0.0
      %397 = vmatpush2.msra.mxu0 0.0
      %398 = vmatprep.subr.mxu0 0.0
      %399 = vmatpush2.msra.mxu0 0.0
      %400 = vmatprep.subr.mxu0 0.0
      %401 = vmatpush2.msra.mxu0 0.0
      %402 = vmatprep.subr.mxu0 0.0
      %403 = vmatpush2.msra.mxu0 0.0
      %404 = vmatprep.subr.mxu0 0.0
      %405 = vmatpush2.msra.mxu0 0.0
      %406 = vmatprep.subr.mxu0 0.0
      %407 = vmatpush2.msra.mxu0 0.0
      %408 = vmatprep.subr.mxu0 0.0
      %409 = vmatpush2.msra.mxu0 0.0
      %410 = vmatprep.subr.mxu0 0.0
      %411 = vmatpush2.msra.mxu0 0.0
      %412 = vmatprep.subr.mxu0 0.0
      %413 = vmatpush2.msra.mxu0 0.0
      %414 = vmatprep.mubr.f32.mxu0 0.0
      %415 = vmatmul.mubr.f32.gmra.mxu0 %v345
      %v416 = vpop.f32.mrf.mxu0
      %v417 = vadd.f32 %v336, %v416
      %v418 = vpop.f32.mrf.mxu0
      %419 = vmatprep.mubr.f32.mxu0 0.0
      %420 = vmatmul.mubr.f32.gmra.mxu0 %v348
      %v421 = vpop.f32.mrf.mxu0
      %v422 = vadd.f32 %v341, %v421
      %v423 = vpop.f32.mrf.mxu0
      %424 = vdwg.mxu0
      %v425 = vld [vmem:[#allocation2 + $0x4] sm:$0xff]
      %v426 = vld [vmem:[#allocation2 + $0xc] sm:$0xff]
      %s427 = scalar_lea.vmem %s1, 128
      %v428 = vld [vmem:[%s427] sm:$0xff]
      %v429 = vld [vmem:[%s427 + $0x8] sm:$0xff]
      %v430 = vld [vmem:[%s427 + $0x10] sm:$0xff]
      %v431 = vld [vmem:[%s427 + $0x18] sm:$0xff]
      %v432 = vld [vmem:[%s427 + $0x20] sm:$0xff]
      %v433 = vld [vmem:[%s427 + $0x28] sm:$0xff]
      %v434 = vld [vmem:[%s427 + $0x30] sm:$0xff]
      %v435 = vld [vmem:[%s427 + $0x38] sm:$0xff]
      %v437 = vsel %vm241, %v425, 0
      %v440 = vsel %vm241, %v426, 0
      %442 = vmatprep.subr.mxu0 0.0
      %443 = vmatpush1.msra.mxu0 0.0
      %444 = vmatprep.subr.mxu0 0.0
      %445 = vmatpush1.msra.mxu0 0.0
      %446 = vmatprep.subr.mxu0 0.0
      %447 = vmatpush1.msra.mxu0 0.0
      %448 = vmatprep.subr.mxu0 0.0
      %449 = vmatpush1.msra.mxu0 0.0
      %450 = vmatprep.subr.mxu0 0.0
      %451 = vmatpush1.msra.mxu0 0.0
      %452 = vmatprep.subr.mxu0 0.0
      %453 = vmatpush1.msra.mxu0 0.0
      %454 = vmatprep.subr.mxu0 0.0
      %455 = vmatpush1.msra.mxu0 0.0
      %456 = vmatprep.subr.mxu0 0.0
      %457 = vmatpush1.msra.mxu0 0.0
      %458 = vmatprep.subr.mxu0 0.0
      %459 = vmatpush1.msra.mxu0 %v435
      %460 = vmatprep.subr.mxu0 0.0
      %461 = vmatpush1.msra.mxu0 %v434
      %462 = vmatprep.subr.mxu0 0.0
      %463 = vmatpush1.msra.mxu0 %v433
      %464 = vmatprep.subr.mxu0 0.0
      %465 = vmatpush1.msra.mxu0 %v432
      %466 = vmatprep.subr.mxu0 0.0
      %467 = vmatpush1.msra.mxu0 %v431
      %468 = vmatprep.subr.mxu0 0.0
      %469 = vmatpush1.msra.mxu0 %v430
      %470 = vmatprep.subr.mxu0 0.0
      %471 = vmatpush1.msra.mxu0 %v429
      %472 = vmatprep.subr.mxu0 0.0
      %473 = vmatpush1.msra.mxu0 %v428
      %474 = vmatprep.subr.mxu0 0.0
      %475 = vmatpush2.msra.mxu0 0.0
      %476 = vmatprep.subr.mxu0 0.0
      %477 = vmatpush2.msra.mxu0 0.0
      %478 = vmatprep.subr.mxu0 0.0
      %479 = vmatpush2.msra.mxu0 0.0
      %480 = vmatprep.subr.mxu0 0.0
      %481 = vmatpush2.msra.mxu0 0.0
      %482 = vmatprep.subr.mxu0 0.0
      %483 = vmatpush2.msra.mxu0 0.0
      %484 = vmatprep.subr.mxu0 0.0
      %485 = vmatpush2.msra.mxu0 0.0
      %486 = vmatprep.subr.mxu0 0.0
      %487 = vmatpush2.msra.mxu0 0.0
      %488 = vmatprep.subr.mxu0 0.0
      %489 = vmatpush2.msra.mxu0 0.0
      %490 = vmatprep.subr.mxu0 0.0
      %491 = vmatpush2.msra.mxu0 0.0
      %492 = vmatprep.subr.mxu0 0.0
      %493 = vmatpush2.msra.mxu0 0.0
      %494 = vmatprep.subr.mxu0 0.0
      %495 = vmatpush2.msra.mxu0 0.0
      %496 = vmatprep.subr.mxu0 0.0
      %497 = vmatpush2.msra.mxu0 0.0
      %498 = vmatprep.subr.mxu0 0.0
      %499 = vmatpush2.msra.mxu0 0.0
      %500 = vmatprep.subr.mxu0 0.0
      %501 = vmatpush2.msra.mxu0 0.0
      %502 = vmatprep.subr.mxu0 0.0
      %503 = vmatpush2.msra.mxu0 0.0
      %504 = vmatprep.subr.mxu0 0.0
      %505 = vmatpush2.msra.mxu0 0.0
      %506 = vmatprep.mubr.f32.mxu0 0.0
      %507 = vmatmul.mubr.f32.gmra.mxu0 %v437
      %v508 = vpop.f32.mrf.mxu0
      %v509 = vadd.f32 0.0, %v508
      %v510 = vpop.f32.mrf.mxu0
      %511 = vmatprep.mubr.f32.mxu0 0.0
      %512 = vmatmul.mubr.f32.gmra.mxu0 %v440
      %v513 = vpop.f32.mrf.mxu0
      %v514 = vadd.f32 0.0, %v513
      %v515 = vpop.f32.mrf.mxu0
      %516 = vdwg.mxu0
      %v517 = vadd.f32 %v417, %v509
      %v518 = vadd.f32 %v422, %v514
      %519 = vst [vmem:[%s231] sm:$0xff] %v517
      %520 = vst [vmem:[%s231 + $0x8] sm:$0xff] %v518
      %v521 = vadd.f32 %v517, %v518
      %v522 = vrot.slane %v521, 4
      %v523 = vadd.f32 %v521, %v522
      %v524 = vrot.slane %v523, 2
      %v525 = vadd.f32 %v523, %v524
      %v526 = vrot.slane %v525, 1
      %v527 = vadd.f32 %v525, %v526
      %v528 = vmul.f32 %v517, %v517
      %v529 = vmul.f32 %v518, %v518
      %v530 = vadd.f32 %v528, %v529
      %v531 = vrot.slane %v530, 4
      %v532 = vadd.f32 %v530, %v531
      %v533 = vrot.slane %v532, 2
      %v534 = vadd.f32 %v532, %v533
      %v535 = vrot.slane %v534, 1
      %v536 = vadd.f32 %v534, %v535
      %v537 = vld [vmem:[%s2] sm:$0xff]
      %v538 = vld [vmem:[%s2 + $0x8] sm:$0xff]
      %v539 = vld [vmem:[%s2 + $0x10] sm:$0xff]
      %v540 = vld [vmem:[%s2 + $0x18] sm:$0xff]
      %v541 = vld [vmem:[%s2 + $0x20] sm:$0xff]
      %v542 = vld [vmem:[%s2 + $0x28] sm:$0xff]
      %v543 = vld [vmem:[%s2 + $0x30] sm:$0xff]
      %v544 = vld [vmem:[%s2 + $0x38] sm:$0xff]
      %545 = vmatprep.subr.mxu0 0.0
      %546 = vmatpush1.msra.mxu0 0.0
      %547 = vmatprep.subr.mxu0 0.0
      %548 = vmatpush1.msra.mxu0 0.0
      %549 = vmatprep.subr.mxu0 0.0
      %550 = vmatpush1.msra.mxu0 0.0
      %551 = vmatprep.subr.mxu0 0.0
      %552 = vmatpush1.msra.mxu0 0.0
      %553 = vmatprep.subr.mxu0 0.0
      %554 = vmatpush1.msra.mxu0 0.0
      %555 = vmatprep.subr.mxu0 0.0
      %556 = vmatpush1.msra.mxu0 0.0
      %557 = vmatprep.subr.mxu0 0.0
      %558 = vmatpush1.msra.mxu0 0.0
      %559 = vmatprep.subr.mxu0 0.0
      %560 = vmatpush1.msra.mxu0 0.0
      %561 = vmatprep.subr.mxu0 0.0
      %562 = vmatpush1.msra.mxu0 %v544
      %563 = vmatprep.subr.mxu0 0.0
      %564 = vmatpush1.msra.mxu0 %v543
      %565 = vmatprep.subr.mxu0 0.0
      %566 = vmatpush1.msra.mxu0 %v542
      %567 = vmatprep.subr.mxu0 0.0
      %568 = vmatpush1.msra.mxu0 %v541
      %569 = vmatprep.subr.mxu0 0.0
      %570 = vmatpush1.msra.mxu0 %v540
      %571 = vmatprep.subr.mxu0 0.0
      %572 = vmatpush1.msra.mxu0 %v539
      %573 = vmatprep.subr.mxu0 0.0
      %574 = vmatpush1.msra.mxu0 %v538
      %575 = vmatprep.subr.mxu0 0.0
      %576 = vmatpush1.msra.mxu0 %v537
      %577 = vmatprep.subr.mxu0 0.0
      %578 = vmatpush2.msra.mxu0 0.0
      %579 = vmatprep.subr.mxu0 0.0
      %580 = vmatpush2.msra.mxu0 0.0
      %581 = vmatprep.subr.mxu0 0.0
      %582 = vmatpush2.msra.mxu0 0.0
      %583 = vmatprep.subr.mxu0 0.0
      %584 = vmatpush2.msra.mxu0 0.0
      %585 = vmatprep.subr.mxu0 0.0
      %586 = vmatpush2.msra.mxu0 0.0
      %587 = vmatprep.subr.mxu0 0.0
      %588 = vmatpush2.msra.mxu0 0.0
      %589 = vmatprep.subr.mxu0 0.0
      %590 = vmatpush2.msra.mxu0 0.0
      %591 = vmatprep.subr.mxu0 0.0
      %592 = vmatpush2.msra.mxu0 0.0
      %593 = vmatprep.subr.mxu0 0.0
      %594 = vmatpush2.msra.mxu0 0.0
      %595 = vmatprep.subr.mxu0 0.0
      %596 = vmatpush2.msra.mxu0 0.0
      %597 = vmatprep.subr.mxu0 0.0
      %598 = vmatpush2.msra.mxu0 0.0
      %599 = vmatprep.subr.mxu0 0.0
      %600 = vmatpush2.msra.mxu0 0.0
      %601 = vmatprep.subr.mxu0 0.0
      %602 = vmatpush2.msra.mxu0 0.0
      %603 = vmatprep.subr.mxu0 0.0
      %604 = vmatpush2.msra.mxu0 0.0
      %605 = vmatprep.subr.mxu0 0.0
      %606 = vmatpush2.msra.mxu0 0.0
      %607 = vmatprep.subr.mxu0 0.0
      %608 = vmatpush2.msra.mxu0 0.0
      %609 = vmatprep.mubr.f32.mxu0 0.0
      %610 = vmatmul.mubr.f32.gmra.mxu0 %v264
      %v611 = vpop.f32.mrf.mxu0
      %v612 = vadd.f32 0.0, %v611
      %v613 = vpop.f32.mrf.mxu0
      %614 = vmatprep.mubr.f32.mxu0 0.0
      %615 = vmatmul.mubr.f32.gmra.mxu0 %v267
      %v616 = vpop.f32.mrf.mxu0
      %v617 = vadd.f32 0.0, %v616
      %v618 = vpop.f32.mrf.mxu0
      %619 = vdwg.mxu0
      %v620 = vadd.f32 %v612, %v617
      %v621 = vrot.slane %v620, 4
      %v622 = vadd.f32 %v620, %v621
      %v623 = vrot.slane %v622, 2
      %v624 = vadd.f32 %v622, %v623
      %v625 = vrot.slane %v624, 1
      %v626 = vadd.f32 %v624, %v625
      %v627 = vmul.f32 %v612, %v612
      %v628 = vmul.f32 %v617, %v617
      %v629 = vadd.f32 %v627, %v628
      %v630 = vrot.slane %v629, 4
      %v631 = vadd.f32 %v629, %v630
      %v632 = vrot.slane %v631, 2
      %v633 = vadd.f32 %v631, %v632
      %v634 = vrot.slane %v633, 1
      %v635 = vadd.f32 %v633, %v634
      %vm636 = vcmask 1040384
      %v637 = vsel %vm636, %v527, %v536
      %vm638 = vcmask 1041408
      %v639 = vsel %vm638, %v637, %v626
      %vm640 = vcmask 1042432
      %v641 = vsel %vm640, %v639, %v635
      %v642 = vld [vmem:[%s3] sm:$0xff]
      %v643 = vld [vmem:[%s3 + $0x8] sm:$0xff]
      %v644 = vld [vmem:[%s3 + $0x10] sm:$0xff]
      %v645 = vld [vmem:[%s3 + $0x18] sm:$0xff]
      %v646 = vld [vmem:[%s3 + $0x20] sm:$0xff]
      %v647 = vld [vmem:[%s3 + $0x28] sm:$0xff]
      %v648 = vld [vmem:[%s3 + $0x30] sm:$0xff]
      %v649 = vld [vmem:[%s3 + $0x38] sm:$0xff]
      %v650 = vld [vmem:[%s3 + $0x40] sm:$0xff]
      %v651 = vld [vmem:[%s3 + $0x48] sm:$0xff]
      %v652 = vld [vmem:[%s3 + $0x50] sm:$0xff]
      %v653 = vld [vmem:[%s3 + $0x58] sm:$0xff]
      %v654 = vld [vmem:[%s3 + $0x60] sm:$0xff]
      %v655 = vld [vmem:[%s3 + $0x68] sm:$0xff]
      %v656 = vld [vmem:[%s3 + $0x70] sm:$0xff]
      %v657 = vld [vmem:[%s3 + $0x78] sm:$0xff]
      %658 = vmatprep.subr.mxu0 0.0
      %659 = vmatpush1.msra.mxu0 %v657
      %660 = vmatprep.subr.mxu0 0.0
      %661 = vmatpush1.msra.mxu0 %v656
      %662 = vmatprep.subr.mxu0 0.0
      %663 = vmatpush1.msra.mxu0 %v655
      %664 = vmatprep.subr.mxu0 0.0
      %665 = vmatpush1.msra.mxu0 %v654
      %666 = vmatprep.subr.mxu0 0.0
      %667 = vmatpush1.msra.mxu0 %v653
      %668 = vmatprep.subr.mxu0 0.0
      %669 = vmatpush1.msra.mxu0 %v652
      %670 = vmatprep.subr.mxu0 0.0
      %671 = vmatpush1.msra.mxu0 %v651
      %672 = vmatprep.subr.mxu0 0.0
      %673 = vmatpush1.msra.mxu0 %v650
      %674 = vmatprep.subr.mxu0 0.0
      %675 = vmatpush1.msra.mxu0 %v649
      %676 = vmatprep.subr.mxu0 0.0
      %677 = vmatpush1.msra.mxu0 %v648
      %678 = vmatprep.subr.mxu0 0.0
      %679 = vmatpush1.msra.mxu0 %v647
      %680 = vmatprep.subr.mxu0 0.0
      %681 = vmatpush1.msra.mxu0 %v646
      %682 = vmatprep.subr.mxu0 0.0
      %683 = vmatpush1.msra.mxu0 %v645
      %684 = vmatprep.subr.mxu0 0.0
      %685 = vmatpush1.msra.mxu0 %v644
      %686 = vmatprep.subr.mxu0 0.0
      %687 = vmatpush1.msra.mxu0 %v643
      %688 = vmatprep.subr.mxu0 0.0
      %689 = vmatpush1.msra.mxu0 %v642
      %690 = vmatprep.subr.mxu0 0.0
      %691 = vmatpush2.msra.mxu0 0.0
      %692 = vmatprep.subr.mxu0 0.0
      %693 = vmatpush2.msra.mxu0 0.0
      %694 = vmatprep.subr.mxu0 0.0
      %695 = vmatpush2.msra.mxu0 0.0
      %696 = vmatprep.subr.mxu0 0.0
      %697 = vmatpush2.msra.mxu0 0.0
      %698 = vmatprep.subr.mxu0 0.0
      %699 = vmatpush2.msra.mxu0 0.0
      %700 = vmatprep.subr.mxu0 0.0
      %701 = vmatpush2.msra.mxu0 0.0
      %702 = vmatprep.subr.mxu0 0.0
      %703 = vmatpush2.msra.mxu0 0.0
      %704 = vmatprep.subr.mxu0 0.0
      %705 = vmatpush2.msra.mxu0 0.0
      %706 = vmatprep.subr.mxu0 0.0
      %707 = vmatpush2.msra.mxu0 0.0
      %708 = vmatprep.subr.mxu0 0.0
      %709 = vmatpush2.msra.mxu0 0.0
      %710 = vmatprep.subr.mxu0 0.0
      %711 = vmatpush2.msra.mxu0 0.0
      %712 = vmatprep.subr.mxu0 0.0
      %713 = vmatpush2.msra.mxu0 0.0
      %714 = vmatprep.subr.mxu0 0.0
      %715 = vmatpush2.msra.mxu0 0.0
      %716 = vmatprep.subr.mxu0 0.0
      %717 = vmatpush2.msra.mxu0 0.0
      %718 = vmatprep.subr.mxu0 0.0
      %719 = vmatpush2.msra.mxu0 0.0
      %720 = vmatprep.subr.mxu0 0.0
      %721 = vmatpush2.msra.mxu0 0.0
      %722 = vmatprep.mubr.f32.mxu0 0.0
      %723 = vmatmul.mubr.f32.gmra.mxu0 %v641
      %v724 = vpop.f32.mrf.mxu0
      %v725 = vadd.f32 0.0, %v724
      %v726 = vpop.f32.mrf.mxu0
      %727 = vdwg.mxu0
      %vm728 = vcmask 60416
      %729 = vst.msk [vmem:[%s235] sm:$0xf] %vm728, %v725
      %p730 = scmp.lt.s32.totalorder %s17, 1
      %s731 = scalar_select %p730, %s17, 1
      %s732 = smul.addr %s731, 2
      %s733 = smul.addr %s732, 8
      %s734 = scalar_lea.vmem %s4, %s733
      %p735 = scmp.lt.s32.totalorder %s17, 1
      %s736 = scalar_select %p735, %s17, 1
      %s737 = smul.addr %s736, 4
      %s738 = scalar_lea.vmem %s5, %s737
      // Predicated region
      $region37: #{dilated_res_block.3} parent=35 // pred_check
        %p739 = pneg %p124
      $region38: #{dilated_res_block.3} parent=35 // pred_check_branch
        %741 = sbr.rel (%p739) target = $region40
      $region39: #{dilated_res_block.3} parent=35 // pred_region
        _
      $region40: #{dilated_res_block.3} parent=35 // pred_fallthru
        _
      // Predicated region
      $region41: #{dilated_res_block.3} parent=35 // pred_check
        %p742 = pneg %p150
      $region42: #{dilated_res_block.3} parent=35 // pred_check_branch
        %744 = sbr.rel (%p742) target = $region44
      $region43: #{dilated_res_block.3} parent=35 // pred_region
        _
      $region44: #{dilated_res_block.3} parent=35 // pred_fallthru
        _
    $region36: #{dilated_res_block.3} parent=5 // pred_fallthru
      _
    %p745 = scmp.le.s32.totalorder 2, %s12
    // Predicated region
    $region45: #{dilated_res_block.3} parent=5 // pred_check
      %p746 = pneg %p745
    $region46: #{dilated_res_block.3} parent=5 // pred_check_branch
      %748 = sbr.rel (%p746) target = $region48
    $region47: #{dilated_res_block.3} parent=5 // pred_region
      %s749 = ssub.s32 %s12, 2
      // Predicated region
      $region49: #{dilated_res_block.3} parent=47 // pred_check
        %p750 = pneg %p130
      $region50: #{dilated_res_block.3} parent=47 // pred_check_branch
        %752 = sbr.rel (%p750) target = $region52
      $region51: #{dilated_res_block.3} parent=47 // pred_region
        %p753 = scmp.lt.s32.totalorder %s18, 1
        %s754 = scalar_select %p753, %s18, 1
        %s755 = smul.addr %s754, 2
        %s756 = smul.addr %s755, 8
        %s757 = scalar_lea.vmem %s4, %s756
      $region52: #{dilated_res_block.3} parent=47 // pred_fallthru
        _
      // Predicated region
      $region53: #{dilated_res_block.3} parent=47 // pred_check
        %p758 = pneg %p156
      $region54: #{dilated_res_block.3} parent=47 // pred_check_branch
        %760 = sbr.rel (%p758) target = $region56
      $region55: #{dilated_res_block.3} parent=47 // pred_region
        %p761 = scmp.lt.s32.totalorder %s18, 1
        %s762 = scalar_select %p761, %s18, 1
        %s763 = smul.addr %s762, 4
        %s764 = scalar_lea.vmem %s5, %s763
      $region56: #{dilated_res_block.3} parent=47 // pred_fallthru
        _
    $region48: #{dilated_res_block.3} parent=5 // pred_fallthru
      _
  $region6: #{dilated_res_block.3} parent=0 // loop_footer
    %s16 = sadd.s32 1, %s12
  $region7: #{dilated_res_block.3} parent=0 // loop_footer_branch
    %11 = sbr.rel target = $region3
  $region8: #{dilated_res_block.3} parent=0 // loop_exit
    _

</llo_original>
